<compile_context>
chip_gen: v5e
topology: v5e:2x2
jax: 0.10.0
libtpu: 0.0.40
codegen_flags: <defaults>
</compile_context>

<pallas_src>
import jax
import jax.numpy as jnp
from jax.experimental import pallas as pl
from jax.experimental.pallas import tpu as pltpu

K_COEF = 8.0     # 'k' in the module
E_COEF = 0.01    # 'e' in the module

LANE = 128
SUBLANE = 8


def _round_up(x, m):
    return (x + m - 1) // m * m


def _pick_tile(d_pad):
    # Symmetric TK == TN so the streamed u tile at k == j is exactly column tile j.
    for t in (512, 256, 128):
        if d_pad % t == 0:
            return t
    return d_pad


# --------------------------------------------------------------------------
# Fused kernel: diffusion matmul (tiled, bf16 stream) + pointwise MLP + reaction
# --------------------------------------------------------------------------
def _apmodel_uv_kernel(u_ref, v_ref, st_ref, tab_ref, pde1_ref, pde2_ref, acc_ref):
    j = pl.program_id(0)            # output-column tile (parallel)
    k = pl.program_id(1)            # contraction tile  (arbitrary, innermost)
    nk = pl.num_programs(1)
    H = tab_ref.shape[1]

    @pl.when(k == 0)
    def _init():
        acc_ref[...] = jnp.zeros_like(acc_ref)

    # diffusion: acc_j += u_k @ S^T[k, j]   (bf16 MXU stream, f32 accumulation)
    acc_ref[...] += jnp.dot(u_ref[...].astype(jnp.bfloat16), st_ref[...],
                            preferred_element_type=jnp.float32)

    # Pointwise reaction + MLP exactly once per j: with TK == TN the u tile at k == j
    # is column tile j; the v tile is pinned to j by its index map (DMA'd once per j).
    @pl.when(k == j)
    def _reaction():
        u = u_ref[...]                                   # (B_p, TILE) f32
        v = v_ref[...]
        par = tab_ref[5, 0]                              # SMEM scalars
        b2 = tab_ref[4, 0]

        # self.nn(uv): 2 -> H -> 1 tanh MLP, statically unrolled over H on lane-dense
        # tiles; per-h weights are SMEM scalar loads broadcast by the VPU.
        nn_acc = jnp.zeros_like(u) + b2
        for h in range(H):
            hid = jnp.tanh(u * tab_ref[0, h] + v * tab_ref[1, h] + tab_ref[2, h])
            nn_acc = nn_acc + tab_ref[3, h] * hid

        # reaction part of pde1 folds into the matmul accumulator
        acc_ref[...] += K_COEF * u * (1.0 - u) * (u - par) - nn_acc
        # pde2 is purely pointwise -> store now (block persists until j changes)
        pde2_ref[...] = -E_COEF * (K_COEF * u * (u - par - 1.0) + v)

    @pl.when(k == nk - 1)
    def _finalize():
        pde1_ref[...] = acc_ref[...]


# --------------------------------------------------------------------------
# Wrapper
# --------------------------------------------------------------------------
def apmodel_uv_forward(params, t, y):
    """Pallas forward of APModel_uv.forward(t, y) (adjoint=False). `t` is unused."""
    del t                                       # unused by the module's forward
    B, twoD = y.shape
    D = twoD // 2
    assert twoD == 2 * D

    s_t = params["s_t"]                         # (D_p, D_p) bf16, zero-padded S^T
    tab = params["mlp_tab"]                     # (6, H) f32: [w1u; w1v; b1; w2; b2; par]
    assert tab.shape[0] == 6
    D_p = s_t.shape[0]
    assert s_t.shape == (D_p, D_p) and D_p >= D and D_p % LANE == 0

    # Pad batch to a full sublane tile (>=8). NOTE: real wall-clock amortization of the
    # S^T stream needs a real batch (multiple ODE states / RK stages per call).
    B_p = _round_up(max(B, SUBLANE), SUBLANE)
    tile = _pick_tile(D_p)
    n_tiles = D_p // tile

    # Batch-first split + zero-pad: padded rows/cols contribute zeros to the matmul
    # and only land in output rows/cols that are sliced off below.
    u = jnp.zeros((B_p, D_p), jnp.float32).at[:B, :D].set(y[:, :D])
    v = jnp.zeros((B_p, D_p), jnp.float32).at[:B, :D].set(y[:, D:])

    vmem_bytes = (2 * tile * tile * 2            # S^T double buffer (bf16)
                  + 2 * 2 * B_p * tile * 4       # u & v double buffers
                  + 2 * 2 * B_p * tile * 4       # pde1 / pde2 output buffers
                  + B_p * tile * 4)              # accumulator
    H = tab.shape[1]
    cost = pl.CostEstimate(
        flops=2 * B_p * D_p * D_p + 2 * B_p * D_p * (3 * H + 10),
        transcendentals=B_p * D_p * H,
        bytes_accessed=D_p * D_p * 2 + 4 * B_p * D_p * 4)

    pde1, pde2 = pl.pallas_call(
        _apmodel_uv_kernel,
        out_shape=(jax.ShapeDtypeStruct((B_p, D_p), jnp.float32),
                   jax.ShapeDtypeStruct((B_p, D_p), jnp.float32)),
        grid_spec=pltpu.PrefetchScalarGridSpec(
            num_scalar_prefetch=0,
            grid=(n_tiles, n_tiles),
            in_specs=[
                pl.BlockSpec((B_p, tile), lambda j, k: (0, k)),    # u, streamed over k
                pl.BlockSpec((B_p, tile), lambda j, k: (0, j)),    # v, pinned to j
                pl.BlockSpec((tile, tile), lambda j, k: (k, j)),   # S^T tiles (bf16)
                pl.BlockSpec(memory_space=pltpu.MemorySpace.SMEM), # packed scalar table
            ],
            out_specs=[
                pl.BlockSpec((B_p, tile), lambda j, k: (0, j)),    # pde1 (batch-first)
                pl.BlockSpec((B_p, tile), lambda j, k: (0, j)),    # pde2 (batch-first)
            ],
            scratch_shapes=[pltpu.VMEM((B_p, tile), jnp.float32)]),
        compiler_params=pltpu.CompilerParams(
            dimension_semantics=("parallel", "arbitrary"),
            vmem_limit_bytes=max(2 * vmem_bytes, 16 * 1024 * 1024)),
        cost_estimate=cost,
    )(u, v, s_t, tab)

    # val = torch.t(cat((pde1, pde2), dim=0)) == [pde1_bf | pde2_bf]; strip padding.
    return jnp.concatenate((pde1[:B, :D], pde2[:B, :D]), axis=1)


apmodel_uv_forward = jax.jit(apmodel_uv_forward)


# --------------------------------------------------------------------------
# Parameter construction (torch-layout copies + kernel-layout copies)
# --------------------------------------------------------------------------
def make_params(key, dimD, hidden, par_value=0.15):
    ks = jax.random.split(key, 5)
    S = jax.random.normal(ks[0], (dimD, dimD), jnp.float32) / (dimD ** 0.5)
    lim1 = 1.0 / (2.0 ** 0.5)
    w1 = jax.random.uniform(ks[1], (hidden, 2), jnp.float32, -lim1, lim1)   # Linear(2, H)
    b1 = jax.random.uniform(ks[2], (hidden,), jnp.float32, -lim1, lim1)
    lim2 = 1.0 / (hidden ** 0.5)
    w2 = jax.random.uniform(ks[3], (1, hidden), jnp.float32, -lim2, lim2)   # Linear(H, 1)
    b2 = jax.random.uniform(ks[4], (1,), jnp.float32, -lim2, lim2)

    D_p = _round_up(max(dimD, LANE), LANE)
    s_t_pad = jnp.zeros((D_p, D_p), jnp.float32).at[:dimD, :dimD].set(S.T)

    mlp_tab = jnp.zeros((6, hidden), jnp.float32)
    mlp_tab = mlp_tab.at[0].set(w1[:, 0])       # first-layer weights acting on u
    mlp_tab = mlp_tab.at[1].set(w1[:, 1])       # first-layer weights acting on v
    mlp_tab = mlp_tab.at[2].set(b1)
    mlp_tab = mlp_tab.at[3].set(w2[0])
    mlp_tab = mlp_tab.at[4, 0].set(b2[0])
    mlp_tab = mlp_tab.at[5, 0].set(par_value)

    torch_like = dict(S=S, w1=w1, b1=b1, w2=w2, b2=b2, par=jnp.float32(par_value))
    kernel_params = dict(
        s_t=s_t_pad.astype(jnp.bfloat16),       # bf16 HBM stream; f32 MXU accumulation
        mlp_tab=mlp_tab,                        # SMEM scalar table
    )
    return kernel_params, torch_like


# --------------------------------------------------------------------------
# Pure-JAX literal transcription of the PyTorch forward (correctness check)
# --------------------------------------------------------------------------
def reference_forward(tp, y, batch_size, dimD):
    S, w1, b1, w2, b2, par = tp["S"], tp["w1"], tp["b1"], tp["w2"], tp["b2"], tp["par"]
    hp = jax.lax.Precision.HIGHEST
    uv = jnp.concatenate((y[:, 0:dimD][:, :, None],
                          y[:, dimD:2 * dimD][:, :, None]), axis=2).reshape(-1, 2)
    u = y[:, 0:dimD].T
    v = y[:, dimD:2 * dimD].T
    hid = jnp.tanh(jnp.dot(uv, w1.T, precision=hp) + b1)
    nn_out = (jnp.dot(hid, w2.T, precision=hp) + b2).reshape(batch_size, dimD)
    k, e = 8.0, 0.01
    MK = jnp.dot(S, u, precision=hp)
    pde1 = MK + k * u * (1.0 - u) * (u - par) - nn_out.T
    pde2 = -e * (k * u * (u - par - 1.0) + v)
    return jnp.concatenate((pde1, pde2), axis=0).T


# --------------------------------------------------------------------------
if __name__ == "__main__":
    batch_size, dimD, hidden = 2, 16, 32

    key = jax.random.PRNGKey(0)
    ky, kp = jax.random.split(key)
    y = jax.random.normal(ky, (batch_size, 2 * dimD), jnp.float32)   # state [u | v]
    t = jnp.float32(0.0)                                             # unused, as in the module
    kernel_params, torch_like = make_params(kp, dimD, hidden)

    out = apmodel_uv_forward(kernel_params, t, y)
    out = jax.block_until_ready(out)

    ref = reference_forward(torch_like, y, batch_size, dimD)
    assert out.shape == (batch_size, 2 * dimD)
    assert jnp.allclose(out, ref, rtol=1e-2, atol=1e-2), (out, ref)

    print("KERNEL_OK")
</pallas_src>

<mosaic_0001>
module attributes {stable_mosaic.version = 11 : i64} {
  func.func @_apmodel_uv_kernel(%arg0: i32, %arg1: i32, %arg2: memref<8x128xf32, #tpu.memory_space<vmem>>, %arg3: memref<8x128xf32, #tpu.memory_space<vmem>>, %arg4: memref<128x128xbf16, #tpu.memory_space<vmem>>, %arg5: memref<6x32xf32, #tpu.memory_space<smem>>, %arg6: memref<8x128xf32, #tpu.memory_space<vmem>>, %arg7: memref<8x128xf32, #tpu.memory_space<vmem>>, %arg8: memref<8x128xf32, #tpu.memory_space<vmem>>) attributes {dimension_semantics = [#tpu.dimension_semantics<parallel>, #tpu.dimension_semantics<arbitrary>], iteration_bounds = array<i64: 1, 1>, scalar_prefetch = 0 : i64, scratch_operands = 1 : i64, tpu.core_type = #tpu.core_type<tc>, window_params = [{transform_indices = @transform_0, window_bounds = array<i64: 8, 128>}, {transform_indices = @transform_1, window_bounds = array<i64: 8, 128>}, {transform_indices = @transform_2, window_bounds = array<i64: 128, 128>}, {transform_indices = @transform_3, window_bounds = array<i64: 6, 32>}, {transform_indices = @transform_4, window_bounds = array<i64: 8, 128>}, {transform_indices = @transform_5, window_bounds = array<i64: 8, 128>}]} {
    %c0_i32 = arith.constant 0 : i32
    %0 = arith.cmpi eq, %arg1, %c0_i32 : i32
    %1 = arith.extui %0 : i1 to i32
    %c0_i32_0 = arith.constant 0 : i32
    %2 = arith.cmpi ne, %1, %c0_i32_0 : i32
    scf.if %2 {
      %cst_11 = arith.constant 0.000000e+00 : f32
      %16 = vector.broadcast %cst_11 : f32 to vector<8x128xf32>
      %c0_12 = arith.constant 0 : index
      %c0_13 = arith.constant 0 : index
      %17 = vector.load %arg8[%c0_12, %c0_13] : memref<8x128xf32, #tpu.memory_space<vmem>>, vector<8x128xf32>
      tpu.vector_store %arg8[%c0_12, %c0_13], %16 {strides = array<i32>} : memref<8x128xf32, #tpu.memory_space<vmem>>, vector<8x128xf32>,
    } else {
    }
    %c0 = arith.constant 0 : index
    %c0_1 = arith.constant 0 : index
    %3 = vector.load %arg8[%c0, %c0_1] : memref<8x128xf32, #tpu.memory_space<vmem>>, vector<8x128xf32>
    %c0_2 = arith.constant 0 : index
    %c0_3 = arith.constant 0 : index
    %4 = vector.load %arg2[%c0_2, %c0_3] : memref<8x128xf32, #tpu.memory_space<vmem>>, vector<8x128xf32>
    %5 = arith.truncf %4 : vector<8x128xf32> to vector<8x128xbf16>
    %c0_4 = arith.constant 0 : index
    %c0_5 = arith.constant 0 : index
    %6 = vector.load %arg4[%c0_4, %c0_5] : memref<128x128xbf16, #tpu.memory_space<vmem>>, vector<128x128xbf16>
    %cst = arith.constant dense<0.000000e+00> : vector<8x128xf32>
    %7 = tpu.matmul %5, %6, %cst {dimension_numbers = #tpu.dot_dimension_numbers<[1], [0], [0], [1], [0, 0, 1, 1], [], []>} : vector<8x128xbf16>, vector<128x128xbf16>, vector<8x128xf32> -> vector<8x128xf32>
    %8 = arith.addf %3, %7 : vector<8x128xf32>
    %c0_6 = arith.constant 0 : index
    %c0_7 = arith.constant 0 : index
    %9 = vector.load %arg8[%c0_6, %c0_7] : memref<8x128xf32, #tpu.memory_space<vmem>>, vector<8x128xf32>
    tpu.vector_store %arg8[%c0_6, %c0_7], %8 {strides = array<i32>} : memref<8x128xf32, #tpu.memory_space<vmem>>, vector<8x128xf32>,
    %10 = arith.cmpi eq, %arg1, %arg0 : i32
    %11 = arith.extui %10 : i1 to i32
    %c0_i32_8 = arith.constant 0 : i32
    %12 = arith.cmpi ne, %11, %c0_i32_8 : i32
    scf.if %12 {
      %c0_11 = arith.constant 0 : index
      %c0_12 = arith.constant 0 : index
      %16 = vector.load %arg2[%c0_11, %c0_12] : memref<8x128xf32, #tpu.memory_space<vmem>>, vector<8x128xf32>
      %c0_13 = arith.constant 0 : index
      %c0_14 = arith.constant 0 : index
      %17 = vector.load %arg3[%c0_13, %c0_14] : memref<8x128xf32, #tpu.memory_space<vmem>>, vector<8x128xf32>
      %c5 = arith.constant 5 : index
      %c0_15 = arith.constant 0 : index
      %18 = memref.load %arg5[%c5, %c0_15] : memref<6x32xf32, #tpu.memory_space<smem>>
      %c4 = arith.constant 4 : index
      %c0_16 = arith.constant 0 : index
      %19 = memref.load %arg5[%c4, %c0_16] : memref<6x32xf32, #tpu.memory_space<smem>>
      %cst_17 = arith.constant 0.000000e+00 : f32
      %20 = vector.broadcast %cst_17 : f32 to vector<8x128xf32>
      %21 = vector.broadcast %19 : f32 to vector<8x128xf32>
      %22 = arith.addf %20, %21 : vector<8x128xf32>
      %c0_18 = arith.constant 0 : index
      %c0_19 = arith.constant 0 : index
      %23 = memref.load %arg5[%c0_18, %c0_19] : memref<6x32xf32, #tpu.memory_space<smem>>
      %24 = vector.broadcast %23 : f32 to vector<8x128xf32>
      %25 = arith.mulf %16, %24 : vector<8x128xf32>
      %c1 = arith.constant 1 : index
      %c0_20 = arith.constant 0 : index
      %26 = memref.load %arg5[%c1, %c0_20] : memref<6x32xf32, #tpu.memory_space<smem>>
      %27 = vector.broadcast %26 : f32 to vector<8x128xf32>
      %28 = arith.mulf %17, %27 : vector<8x128xf32>
      %29 = arith.addf %25, %28 : vector<8x128xf32>
      %c2 = arith.constant 2 : index
      %c0_21 = arith.constant 0 : index
      %30 = memref.load %arg5[%c2, %c0_21] : memref<6x32xf32, #tpu.memory_space<smem>>
      %31 = vector.broadcast %30 : f32 to vector<8x128xf32>
      %32 = arith.addf %29, %31 : vector<8x128xf32>
      %33 = math.tanh %32 : vector<8x128xf32>
      %c3 = arith.constant 3 : index
      %c0_22 = arith.constant 0 : index
      %34 = memref.load %arg5[%c3, %c0_22] : memref<6x32xf32, #tpu.memory_space<smem>>
      %35 = vector.broadcast %34 : f32 to vector<8x128xf32>
      %36 = arith.mulf %35, %33 : vector<8x128xf32>
      %37 = arith.addf %22, %36 : vector<8x128xf32>
      %c0_23 = arith.constant 0 : index
      %c1_24 = arith.constant 1 : index
      %38 = memref.load %arg5[%c0_23, %c1_24] : memref<6x32xf32, #tpu.memory_space<smem>>
      %39 = vector.broadcast %38 : f32 to vector<8x128xf32>
      %40 = arith.mulf %16, %39 : vector<8x128xf32>
      %c1_25 = arith.constant 1 : index
      %c1_26 = arith.constant 1 : index
      %41 = memref.load %arg5[%c1_25, %c1_26] : memref<6x32xf32, #tpu.memory_space<smem>>
      %42 = vector.broadcast %41 : f32 to vector<8x128xf32>
      %43 = arith.mulf %17, %42 : vector<8x128xf32>
      %44 = arith.addf %40, %43 : vector<8x128xf32>
      %c2_27 = arith.constant 2 : index
      %c1_28 = arith.constant 1 : index
      %45 = memref.load %arg5[%c2_27, %c1_28] : memref<6x32xf32, #tpu.memory_space<smem>>
      %46 = vector.broadcast %45 : f32 to vector<8x128xf32>
      %47 = arith.addf %44, %46 : vector<8x128xf32>
      %48 = math.tanh %47 : vector<8x128xf32>
      %c3_29 = arith.constant 3 : index
      %c1_30 = arith.constant 1 : index
      %49 = memref.load %arg5[%c3_29, %c1_30] : memref<6x32xf32, #tpu.memory_space<smem>>
      %50 = vector.broadcast %49 : f32 to vector<8x128xf32>
      %51 = arith.mulf %50, %48 : vector<8x128xf32>
      %52 = arith.addf %37, %51 : vector<8x128xf32>
      %c0_31 = arith.constant 0 : index
      %c2_32 = arith.constant 2 : index
      %53 = memref.load %arg5[%c0_31, %c2_32] : memref<6x32xf32, #tpu.memory_space<smem>>
      %54 = vector.broadcast %53 : f32 to vector<8x128xf32>
      %55 = arith.mulf %16, %54 : vector<8x128xf32>
      %c1_33 = arith.constant 1 : index
      %c2_34 = arith.constant 2 : index
      %56 = memref.load %arg5[%c1_33, %c2_34] : memref<6x32xf32, #tpu.memory_space<smem>>
      %57 = vector.broadcast %56 : f32 to vector<8x128xf32>
      %58 = arith.mulf %17, %57 : vector<8x128xf32>
      %59 = arith.addf %55, %58 : vector<8x128xf32>
      %c2_35 = arith.constant 2 : index
      %c2_36 = arith.constant 2 : index
      %60 = memref.load %arg5[%c2_35, %c2_36] : memref<6x32xf32, #tpu.memory_space<smem>>
      %61 = vector.broadcast %60 : f32 to vector<8x128xf32>
      %62 = arith.addf %59, %61 : vector<8x128xf32>
      %63 = math.tanh %62 : vector<8x128xf32>
      %c3_37 = arith.constant 3 : index
      %c2_38 = arith.constant 2 : index
      %64 = memref.load %arg5[%c3_37, %c2_38] : memref<6x32xf32, #tpu.memory_space<smem>>
      %65 = vector.broadcast %64 : f32 to vector<8x128xf32>
      %66 = arith.mulf %65, %63 : vector<8x128xf32>
      %67 = arith.addf %52, %66 : vector<8x128xf32>
      %c0_39 = arith.constant 0 : index
      %c3_40 = arith.constant 3 : index
      %68 = memref.load %arg5[%c0_39, %c3_40] : memref<6x32xf32, #tpu.memory_space<smem>>
      %69 = vector.broadcast %68 : f32 to vector<8x128xf32>
      %70 = arith.mulf %16, %69 : vector<8x128xf32>
      %c1_41 = arith.constant 1 : index
      %c3_42 = arith.constant 3 : index
      %71 = memref.load %arg5[%c1_41, %c3_42] : memref<6x32xf32, #tpu.memory_space<smem>>
      %72 = vector.broadcast %71 : f32 to vector<8x128xf32>
      %73 = arith.mulf %17, %72 : vector<8x128xf32>
      %74 = arith.addf %70, %73 : vector<8x128xf32>
      %c2_43 = arith.constant 2 : index
      %c3_44 = arith.constant 3 : index
      %75 = memref.load %arg5[%c2_43, %c3_44] : memref<6x32xf32, #tpu.memory_space<smem>>
      %76 = vector.broadcast %75 : f32 to vector<8x128xf32>
      %77 = arith.addf %74, %76 : vector<8x128xf32>
      %78 = math.tanh %77 : vector<8x128xf32>
      %c3_45 = arith.constant 3 : index
      %c3_46 = arith.constant 3 : index
      %79 = memref.load %arg5[%c3_45, %c3_46] : memref<6x32xf32, #tpu.memory_space<smem>>
      %80 = vector.broadcast %79 : f32 to vector<8x128xf32>
      %81 = arith.mulf %80, %78 : vector<8x128xf32>
      %82 = arith.addf %67, %81 : vector<8x128xf32>
      %c0_47 = arith.constant 0 : index
      %c4_48 = arith.constant 4 : index
      %83 = memref.load %arg5[%c0_47, %c4_48] : memref<6x32xf32, #tpu.memory_space<smem>>
      %84 = vector.broadcast %83 : f32 to vector<8x128xf32>
      %85 = arith.mulf %16, %84 : vector<8x128xf32>
      %c1_49 = arith.constant 1 : index
      %c4_50 = arith.constant 4 : index
      %86 = memref.load %arg5[%c1_49, %c4_50] : memref<6x32xf32, #tpu.memory_space<smem>>
      %87 = vector.broadcast %86 : f32 to vector<8x128xf32>
      %88 = arith.mulf %17, %87 : vector<8x128xf32>
      %89 = arith.addf %85, %88 : vector<8x128xf32>
      %c2_51 = arith.constant 2 : index
      %c4_52 = arith.constant 4 : index
      %90 = memref.load %arg5[%c2_51, %c4_52] : memref<6x32xf32, #tpu.memory_space<smem>>
      %91 = vector.broadcast %90 : f32 to vector<8x128xf32>
      %92 = arith.addf %89, %91 : vector<8x128xf32>
      %93 = math.tanh %92 : vector<8x128xf32>
      %c3_53 = arith.constant 3 : index
      %c4_54 = arith.constant 4 : index
      %94 = memref.load %arg5[%c3_53, %c4_54] : memref<6x32xf32, #tpu.memory_space<smem>>
      %95 = vector.broadcast %94 : f32 to vector<8x128xf32>
      %96 = arith.mulf %95, %93 : vector<8x128xf32>
      %97 = arith.addf %82, %96 : vector<8x128xf32>
      %c0_55 = arith.constant 0 : index
      %c5_56 = arith.constant 5 : index
      %98 = memref.load %arg5[%c0_55, %c5_56] : memref<6x32xf32, #tpu.memory_space<smem>>
      %99 = vector.broadcast %98 : f32 to vector<8x128xf32>
      %100 = arith.mulf %16, %99 : vector<8x128xf32>
      %c1_57 = arith.constant 1 : index
      %c5_58 = arith.constant 5 : index
      %101 = memref.load %arg5[%c1_57, %c5_58] : memref<6x32xf32, #tpu.memory_space<smem>>
      %102 = vector.broadcast %101 : f32 to vector<8x128xf32>
      %103 = arith.mulf %17, %102 : vector<8x128xf32>
      %104 = arith.addf %100, %103 : vector<8x128xf32>
      %c2_59 = arith.constant 2 : index
      %c5_60 = arith.constant 5 : index
      %105 = memref.load %arg5[%c2_59, %c5_60] : memref<6x32xf32, #tpu.memory_space<smem>>
      %106 = vector.broadcast %105 : f32 to vector<8x128xf32>
      %107 = arith.addf %104, %106 : vector<8x128xf32>
      %108 = math.tanh %107 : vector<8x128xf32>
      %c3_61 = arith.constant 3 : index
      %c5_62 = arith.constant 5 : index
      %109 = memref.load %arg5[%c3_61, %c5_62] : memref<6x32xf32, #tpu.memory_space<smem>>
      %110 = vector.broadcast %109 : f32 to vector<8x128xf32>
      %111 = arith.mulf %110, %108 : vector<8x128xf32>
      %112 = arith.addf %97, %111 : vector<8x128xf32>
      %c0_63 = arith.constant 0 : index
      %c6 = arith.constant 6 : index
      %113 = memref.load %arg5[%c0_63, %c6] : memref<6x32xf32, #tpu.memory_space<smem>>
      %114 = vector.broadcast %113 : f32 to vector<8x128xf32>
      %115 = arith.mulf %16, %114 : vector<8x128xf32>
      %c1_64 = arith.constant 1 : index
      %c6_65 = arith.constant 6 : index
      %116 = memref.load %arg5[%c1_64, %c6_65] : memref<6x32xf32, #tpu.memory_space<smem>>
      %117 = vector.broadcast %116 : f32 to vector<8x128xf32>
      %118 = arith.mulf %17, %117 : vector<8x128xf32>
      %119 = arith.addf %115, %118 : vector<8x128xf32>
      %c2_66 = arith.constant 2 : index
      %c6_67 = arith.constant 6 : index
      %120 = memref.load %arg5[%c2_66, %c6_67] : memref<6x32xf32, #tpu.memory_space<smem>>
      %121 = vector.broadcast %120 : f32 to vector<8x128xf32>
      %122 = arith.addf %119, %121 : vector<8x128xf32>
      %123 = math.tanh %122 : vector<8x128xf32>
      %c3_68 = arith.constant 3 : index
      %c6_69 = arith.constant 6 : index
      %124 = memref.load %arg5[%c3_68, %c6_69] : memref<6x32xf32, #tpu.memory_space<smem>>
      %125 = vector.broadcast %124 : f32 to vector<8x128xf32>
      %126 = arith.mulf %125, %123 : vector<8x128xf32>
      %127 = arith.addf %112, %126 : vector<8x128xf32>
      %c0_70 = arith.constant 0 : index
      %c7 = arith.constant 7 : index
      %128 = memref.load %arg5[%c0_70, %c7] : memref<6x32xf32, #tpu.memory_space<smem>>
      %129 = vector.broadcast %128 : f32 to vector<8x128xf32>
      %130 = arith.mulf %16, %129 : vector<8x128xf32>
      %c1_71 = arith.constant 1 : index
      %c7_72 = arith.constant 7 : index
      %131 = memref.load %arg5[%c1_71, %c7_72] : memref<6x32xf32, #tpu.memory_space<smem>>
      %132 = vector.broadcast %131 : f32 to vector<8x128xf32>
      %133 = arith.mulf %17, %132 : vector<8x128xf32>
      %134 = arith.addf %130, %133 : vector<8x128xf32>
      %c2_73 = arith.constant 2 : index
      %c7_74 = arith.constant 7 : index
      %135 = memref.load %arg5[%c2_73, %c7_74] : memref<6x32xf32, #tpu.memory_space<smem>>
      %136 = vector.broadcast %135 : f32 to vector<8x128xf32>
      %137 = arith.addf %134, %136 : vector<8x128xf32>
      %138 = math.tanh %137 : vector<8x128xf32>
      %c3_75 = arith.constant 3 : index
      %c7_76 = arith.constant 7 : index
      %139 = memref.load %arg5[%c3_75, %c7_76] : memref<6x32xf32, #tpu.memory_space<smem>>
      %140 = vector.broadcast %139 : f32 to vector<8x128xf32>
      %141 = arith.mulf %140, %138 : vector<8x128xf32>
      %142 = arith.addf %127, %141 : vector<8x128xf32>
      %c0_77 = arith.constant 0 : index
      %c8 = arith.constant 8 : index
      %143 = memref.load %arg5[%c0_77, %c8] : memref<6x32xf32, #tpu.memory_space<smem>>
      %144 = vector.broadcast %143 : f32 to vector<8x128xf32>
      %145 = arith.mulf %16, %144 : vector<8x128xf32>
      %c1_78 = arith.constant 1 : index
      %c8_79 = arith.constant 8 : index
      %146 = memref.load %arg5[%c1_78, %c8_79] : memref<6x32xf32, #tpu.memory_space<smem>>
      %147 = vector.broadcast %146 : f32 to vector<8x128xf32>
      %148 = arith.mulf %17, %147 : vector<8x128xf32>
      %149 = arith.addf %145, %148 : vector<8x128xf32>
      %c2_80 = arith.constant 2 : index
      %c8_81 = arith.constant 8 : index
      %150 = memref.load %arg5[%c2_80, %c8_81] : memref<6x32xf32, #tpu.memory_space<smem>>
      %151 = vector.broadcast %150 : f32 to vector<8x128xf32>
      %152 = arith.addf %149, %151 : vector<8x128xf32>
      %153 = math.tanh %152 : vector<8x128xf32>
      %c3_82 = arith.constant 3 : index
      %c8_83 = arith.constant 8 : index
      %154 = memref.load %arg5[%c3_82, %c8_83] : memref<6x32xf32, #tpu.memory_space<smem>>
      %155 = vector.broadcast %154 : f32 to vector<8x128xf32>
      %156 = arith.mulf %155, %153 : vector<8x128xf32>
      %157 = arith.addf %142, %156 : vector<8x128xf32>
      %c0_84 = arith.constant 0 : index
      %c9 = arith.constant 9 : index
      %158 = memref.load %arg5[%c0_84, %c9] : memref<6x32xf32, #tpu.memory_space<smem>>
      %159 = vector.broadcast %158 : f32 to vector<8x128xf32>
      %160 = arith.mulf %16, %159 : vector<8x128xf32>
      %c1_85 = arith.constant 1 : index
      %c9_86 = arith.constant 9 : index
      %161 = memref.load %arg5[%c1_85, %c9_86] : memref<6x32xf32, #tpu.memory_space<smem>>
      %162 = vector.broadcast %161 : f32 to vector<8x128xf32>
      %163 = arith.mulf %17, %162 : vector<8x128xf32>
      %164 = arith.addf %160, %163 : vector<8x128xf32>
      %c2_87 = arith.constant 2 : index
      %c9_88 = arith.constant 9 : index
      %165 = memref.load %arg5[%c2_87, %c9_88] : memref<6x32xf32, #tpu.memory_space<smem>>
      %166 = vector.broadcast %165 : f32 to vector<8x128xf32>
      %167 = arith.addf %164, %166 : vector<8x128xf32>
      %168 = math.tanh %167 : vector<8x128xf32>
      %c3_89 = arith.constant 3 : index
      %c9_90 = arith.constant 9 : index
      %169 = memref.load %arg5[%c3_89, %c9_90] : memref<6x32xf32, #tpu.memory_space<smem>>
      %170 = vector.broadcast %169 : f32 to vector<8x128xf32>
      %171 = arith.mulf %170, %168 : vector<8x128xf32>
      %172 = arith.addf %157, %171 : vector<8x128xf32>
      %c0_91 = arith.constant 0 : index
      %c10 = arith.constant 10 : index
      %173 = memref.load %arg5[%c0_91, %c10] : memref<6x32xf32, #tpu.memory_space<smem>>
      %174 = vector.broadcast %173 : f32 to vector<8x128xf32>
      %175 = arith.mulf %16, %174 : vector<8x128xf32>
      %c1_92 = arith.constant 1 : index
      %c10_93 = arith.constant 10 : index
      %176 = memref.load %arg5[%c1_92, %c10_93] : memref<6x32xf32, #tpu.memory_space<smem>>
      %177 = vector.broadcast %176 : f32 to vector<8x128xf32>
      %178 = arith.mulf %17, %177 : vector<8x128xf32>
      %179 = arith.addf %175, %178 : vector<8x128xf32>
      %c2_94 = arith.constant 2 : index
      %c10_95 = arith.constant 10 : index
      %180 = memref.load %arg5[%c2_94, %c10_95] : memref<6x32xf32, #tpu.memory_space<smem>>
      %181 = vector.broadcast %180 : f32 to vector<8x128xf32>
      %182 = arith.addf %179, %181 : vector<8x128xf32>
      %183 = math.tanh %182 : vector<8x128xf32>
      %c3_96 = arith.constant 3 : index
      %c10_97 = arith.constant 10 : index
      %184 = memref.load %arg5[%c3_96, %c10_97] : memref<6x32xf32, #tpu.memory_space<smem>>
      %185 = vector.broadcast %184 : f32 to vector<8x128xf32>
      %186 = arith.mulf %185, %183 : vector<8x128xf32>
      %187 = arith.addf %172, %186 : vector<8x128xf32>
      %c0_98 = arith.constant 0 : index
      %c11 = arith.constant 11 : index
      %188 = memref.load %arg5[%c0_98, %c11] : memref<6x32xf32, #tpu.memory_space<smem>>
      %189 = vector.broadcast %188 : f32 to vector<8x128xf32>
      %190 = arith.mulf %16, %189 : vector<8x128xf32>
      %c1_99 = arith.constant 1 : index
      %c11_100 = arith.constant 11 : index
      %191 = memref.load %arg5[%c1_99, %c11_100] : memref<6x32xf32, #tpu.memory_space<smem>>
      %192 = vector.broadcast %191 : f32 to vector<8x128xf32>
      %193 = arith.mulf %17, %192 : vector<8x128xf32>
      %194 = arith.addf %190, %193 : vector<8x128xf32>
      %c2_101 = arith.constant 2 : index
      %c11_102 = arith.constant 11 : index
      %195 = memref.load %arg5[%c2_101, %c11_102] : memref<6x32xf32, #tpu.memory_space<smem>>
      %196 = vector.broadcast %195 : f32 to vector<8x128xf32>
      %197 = arith.addf %194, %196 : vector<8x128xf32>
      %198 = math.tanh %197 : vector<8x128xf32>
      %c3_103 = arith.constant 3 : index
      %c11_104 = arith.constant 11 : index
      %199 = memref.load %arg5[%c3_103, %c11_104] : memref<6x32xf32, #tpu.memory_space<smem>>
      %200 = vector.broadcast %199 : f32 to vector<8x128xf32>
      %201 = arith.mulf %200, %198 : vector<8x128xf32>
      %202 = arith.addf %187, %201 : vector<8x128xf32>
      %c0_105 = arith.constant 0 : index
      %c12 = arith.constant 12 : index
      %203 = memref.load %arg5[%c0_105, %c12] : memref<6x32xf32, #tpu.memory_space<smem>>
      %204 = vector.broadcast %203 : f32 to vector<8x128xf32>
      %205 = arith.mulf %16, %204 : vector<8x128xf32>
      %c1_106 = arith.constant 1 : index
      %c12_107 = arith.constant 12 : index
      %206 = memref.load %arg5[%c1_106, %c12_107] : memref<6x32xf32, #tpu.memory_space<smem>>
      %207 = vector.broadcast %206 : f32 to vector<8x128xf32>
      %208 = arith.mulf %17, %207 : vector<8x128xf32>
      %209 = arith.addf %205, %208 : vector<8x128xf32>
      %c2_108 = arith.constant 2 : index
      %c12_109 = arith.constant 12 : index
      %210 = memref.load %arg5[%c2_108, %c12_109] : memref<6x32xf32, #tpu.memory_space<smem>>
      %211 = vector.broadcast %210 : f32 to vector<8x128xf32>
      %212 = arith.addf %209, %211 : vector<8x128xf32>
      %213 = math.tanh %212 : vector<8x128xf32>
      %c3_110 = arith.constant 3 : index
      %c12_111 = arith.constant 12 : index
      %214 = memref.load %arg5[%c3_110, %c12_111] : memref<6x32xf32, #tpu.memory_space<smem>>
      %215 = vector.broadcast %214 : f32 to vector<8x128xf32>
      %216 = arith.mulf %215, %213 : vector<8x128xf32>
      %217 = arith.addf %202, %216 : vector<8x128xf32>
      %c0_112 = arith.constant 0 : index
      %c13 = arith.constant 13 : index
      %218 = memref.load %arg5[%c0_112, %c13] : memref<6x32xf32, #tpu.memory_space<smem>>
      %219 = vector.broadcast %218 : f32 to vector<8x128xf32>
      %220 = arith.mulf %16, %219 : vector<8x128xf32>
      %c1_113 = arith.constant 1 : index
      %c13_114 = arith.constant 13 : index
      %221 = memref.load %arg5[%c1_113, %c13_114] : memref<6x32xf32, #tpu.memory_space<smem>>
      %222 = vector.broadcast %221 : f32 to vector<8x128xf32>
      %223 = arith.mulf %17, %222 : vector<8x128xf32>
      %224 = arith.addf %220, %223 : vector<8x128xf32>
      %c2_115 = arith.constant 2 : index
      %c13_116 = arith.constant 13 : index
      %225 = memref.load %arg5[%c2_115, %c13_116] : memref<6x32xf32, #tpu.memory_space<smem>>
      %226 = vector.broadcast %225 : f32 to vector<8x128xf32>
      %227 = arith.addf %224, %226 : vector<8x128xf32>
      %228 = math.tanh %227 : vector<8x128xf32>
      %c3_117 = arith.constant 3 : index
      %c13_118 = arith.constant 13 : index
      %229 = memref.load %arg5[%c3_117, %c13_118] : memref<6x32xf32, #tpu.memory_space<smem>>
      %230 = vector.broadcast %229 : f32 to vector<8x128xf32>
      %231 = arith.mulf %230, %228 : vector<8x128xf32>
      %232 = arith.addf %217, %231 : vector<8x128xf32>
      %c0_119 = arith.constant 0 : index
      %c14 = arith.constant 14 : index
      %233 = memref.load %arg5[%c0_119, %c14] : memref<6x32xf32, #tpu.memory_space<smem>>
      %234 = vector.broadcast %233 : f32 to vector<8x128xf32>
      %235 = arith.mulf %16, %234 : vector<8x128xf32>
      %c1_120 = arith.constant 1 : index
      %c14_121 = arith.constant 14 : index
      %236 = memref.load %arg5[%c1_120, %c14_121] : memref<6x32xf32, #tpu.memory_space<smem>>
      %237 = vector.broadcast %236 : f32 to vector<8x128xf32>
      %238 = arith.mulf %17, %237 : vector<8x128xf32>
      %239 = arith.addf %235, %238 : vector<8x128xf32>
      %c2_122 = arith.constant 2 : index
      %c14_123 = arith.constant 14 : index
      %240 = memref.load %arg5[%c2_122, %c14_123] : memref<6x32xf32, #tpu.memory_space<smem>>
      %241 = vector.broadcast %240 : f32 to vector<8x128xf32>
      %242 = arith.addf %239, %241 : vector<8x128xf32>
      %243 = math.tanh %242 : vector<8x128xf32>
      %c3_124 = arith.constant 3 : index
      %c14_125 = arith.constant 14 : index
      %244 = memref.load %arg5[%c3_124, %c14_125] : memref<6x32xf32, #tpu.memory_space<smem>>
      %245 = vector.broadcast %244 : f32 to vector<8x128xf32>
      %246 = arith.mulf %245, %243 : vector<8x128xf32>
      %247 = arith.addf %232, %246 : vector<8x128xf32>
      %c0_126 = arith.constant 0 : index
      %c15 = arith.constant 15 : index
      %248 = memref.load %arg5[%c0_126, %c15] : memref<6x32xf32, #tpu.memory_space<smem>>
      %249 = vector.broadcast %248 : f32 to vector<8x128xf32>
      %250 = arith.mulf %16, %249 : vector<8x128xf32>
      %c1_127 = arith.constant 1 : index
      %c15_128 = arith.constant 15 : index
      %251 = memref.load %arg5[%c1_127, %c15_128] : memref<6x32xf32, #tpu.memory_space<smem>>
      %252 = vector.broadcast %251 : f32 to vector<8x128xf32>
      %253 = arith.mulf %17, %252 : vector<8x128xf32>
      %254 = arith.addf %250, %253 : vector<8x128xf32>
      %c2_129 = arith.constant 2 : index
      %c15_130 = arith.constant 15 : index
      %255 = memref.load %arg5[%c2_129, %c15_130] : memref<6x32xf32, #tpu.memory_space<smem>>
      %256 = vector.broadcast %255 : f32 to vector<8x128xf32>
      %257 = arith.addf %254, %256 : vector<8x128xf32>
      %258 = math.tanh %257 : vector<8x128xf32>
      %c3_131 = arith.constant 3 : index
      %c15_132 = arith.constant 15 : index
      %259 = memref.load %arg5[%c3_131, %c15_132] : memref<6x32xf32, #tpu.memory_space<smem>>
      %260 = vector.broadcast %259 : f32 to vector<8x128xf32>
      %261 = arith.mulf %260, %258 : vector<8x128xf32>
      %262 = arith.addf %247, %261 : vector<8x128xf32>
      %c0_133 = arith.constant 0 : index
      %c16 = arith.constant 16 : index
      %263 = memref.load %arg5[%c0_133, %c16] : memref<6x32xf32, #tpu.memory_space<smem>>
      %264 = vector.broadcast %263 : f32 to vector<8x128xf32>
      %265 = arith.mulf %16, %264 : vector<8x128xf32>
      %c1_134 = arith.constant 1 : index
      %c16_135 = arith.constant 16 : index
      %266 = memref.load %arg5[%c1_134, %c16_135] : memref<6x32xf32, #tpu.memory_space<smem>>
      %267 = vector.broadcast %266 : f32 to vector<8x128xf32>
      %268 = arith.mulf %17, %267 : vector<8x128xf32>
      %269 = arith.addf %265, %268 : vector<8x128xf32>
      %c2_136 = arith.constant 2 : index
      %c16_137 = arith.constant 16 : index
      %270 = memref.load %arg5[%c2_136, %c16_137] : memref<6x32xf32, #tpu.memory_space<smem>>
      %271 = vector.broadcast %270 : f32 to vector<8x128xf32>
      %272 = arith.addf %269, %271 : vector<8x128xf32>
      %273 = math.tanh %272 : vector<8x128xf32>
      %c3_138 = arith.constant 3 : index
      %c16_139 = arith.constant 16 : index
      %274 = memref.load %arg5[%c3_138, %c16_139] : memref<6x32xf32, #tpu.memory_space<smem>>
      %275 = vector.broadcast %274 : f32 to vector<8x128xf32>
      %276 = arith.mulf %275, %273 : vector<8x128xf32>
      %277 = arith.addf %262, %276 : vector<8x128xf32>
      %c0_140 = arith.constant 0 : index
      %c17 = arith.constant 17 : index
      %278 = memref.load %arg5[%c0_140, %c17] : memref<6x32xf32, #tpu.memory_space<smem>>
      %279 = vector.broadcast %278 : f32 to vector<8x128xf32>
      %280 = arith.mulf %16, %279 : vector<8x128xf32>
      %c1_141 = arith.constant 1 : index
      %c17_142 = arith.constant 17 : index
      %281 = memref.load %arg5[%c1_141, %c17_142] : memref<6x32xf32, #tpu.memory_space<smem>>
      %282 = vector.broadcast %281 : f32 to vector<8x128xf32>
      %283 = arith.mulf %17, %282 : vector<8x128xf32>
      %284 = arith.addf %280, %283 : vector<8x128xf32>
      %c2_143 = arith.constant 2 : index
      %c17_144 = arith.constant 17 : index
      %285 = memref.load %arg5[%c2_143, %c17_144] : memref<6x32xf32, #tpu.memory_space<smem>>
      %286 = vector.broadcast %285 : f32 to vector<8x128xf32>
      %287 = arith.addf %284, %286 : vector<8x128xf32>
      %288 = math.tanh %287 : vector<8x128xf32>
      %c3_145 = arith.constant 3 : index
      %c17_146 = arith.constant 17 : index
      %289 = memref.load %arg5[%c3_145, %c17_146] : memref<6x32xf32, #tpu.memory_space<smem>>
      %290 = vector.broadcast %289 : f32 to vector<8x128xf32>
      %291 = arith.mulf %290, %288 : vector<8x128xf32>
      %292 = arith.addf %277, %291 : vector<8x128xf32>
      %c0_147 = arith.constant 0 : index
      %c18 = arith.constant 18 : index
      %293 = memref.load %arg5[%c0_147, %c18] : memref<6x32xf32, #tpu.memory_space<smem>>
      %294 = vector.broadcast %293 : f32 to vector<8x128xf32>
      %295 = arith.mulf %16, %294 : vector<8x128xf32>
      %c1_148 = arith.constant 1 : index
      %c18_149 = arith.constant 18 : index
      %296 = memref.load %arg5[%c1_148, %c18_149] : memref<6x32xf32, #tpu.memory_space<smem>>
      %297 = vector.broadcast %296 : f32 to vector<8x128xf32>
      %298 = arith.mulf %17, %297 : vector<8x128xf32>
      %299 = arith.addf %295, %298 : vector<8x128xf32>
      %c2_150 = arith.constant 2 : index
      %c18_151 = arith.constant 18 : index
      %300 = memref.load %arg5[%c2_150, %c18_151] : memref<6x32xf32, #tpu.memory_space<smem>>
      %301 = vector.broadcast %300 : f32 to vector<8x128xf32>
      %302 = arith.addf %299, %301 : vector<8x128xf32>
      %303 = math.tanh %302 : vector<8x128xf32>
      %c3_152 = arith.constant 3 : index
      %c18_153 = arith.constant 18 : index
      %304 = memref.load %arg5[%c3_152, %c18_153] : memref<6x32xf32, #tpu.memory_space<smem>>
      %305 = vector.broadcast %304 : f32 to vector<8x128xf32>
      %306 = arith.mulf %305, %303 : vector<8x128xf32>
      %307 = arith.addf %292, %306 : vector<8x128xf32>
      %c0_154 = arith.constant 0 : index
      %c19 = arith.constant 19 : index
      %308 = memref.load %arg5[%c0_154, %c19] : memref<6x32xf32, #tpu.memory_space<smem>>
      %309 = vector.broadcast %308 : f32 to vector<8x128xf32>
      %310 = arith.mulf %16, %309 : vector<8x128xf32>
      %c1_155 = arith.constant 1 : index
      %c19_156 = arith.constant 19 : index
      %311 = memref.load %arg5[%c1_155, %c19_156] : memref<6x32xf32, #tpu.memory_space<smem>>
      %312 = vector.broadcast %311 : f32 to vector<8x128xf32>
      %313 = arith.mulf %17, %312 : vector<8x128xf32>
      %314 = arith.addf %310, %313 : vector<8x128xf32>
      %c2_157 = arith.constant 2 : index
      %c19_158 = arith.constant 19 : index
      %315 = memref.load %arg5[%c2_157, %c19_158] : memref<6x32xf32, #tpu.memory_space<smem>>
      %316 = vector.broadcast %315 : f32 to vector<8x128xf32>
      %317 = arith.addf %314, %316 : vector<8x128xf32>
      %318 = math.tanh %317 : vector<8x128xf32>
      %c3_159 = arith.constant 3 : index
      %c19_160 = arith.constant 19 : index
      %319 = memref.load %arg5[%c3_159, %c19_160] : memref<6x32xf32, #tpu.memory_space<smem>>
      %320 = vector.broadcast %319 : f32 to vector<8x128xf32>
      %321 = arith.mulf %320, %318 : vector<8x128xf32>
      %322 = arith.addf %307, %321 : vector<8x128xf32>
      %c0_161 = arith.constant 0 : index
      %c20 = arith.constant 20 : index
      %323 = memref.load %arg5[%c0_161, %c20] : memref<6x32xf32, #tpu.memory_space<smem>>
      %324 = vector.broadcast %323 : f32 to vector<8x128xf32>
      %325 = arith.mulf %16, %324 : vector<8x128xf32>
      %c1_162 = arith.constant 1 : index
      %c20_163 = arith.constant 20 : index
      %326 = memref.load %arg5[%c1_162, %c20_163] : memref<6x32xf32, #tpu.memory_space<smem>>
      %327 = vector.broadcast %326 : f32 to vector<8x128xf32>
      %328 = arith.mulf %17, %327 : vector<8x128xf32>
      %329 = arith.addf %325, %328 : vector<8x128xf32>
      %c2_164 = arith.constant 2 : index
      %c20_165 = arith.constant 20 : index
      %330 = memref.load %arg5[%c2_164, %c20_165] : memref<6x32xf32, #tpu.memory_space<smem>>
      %331 = vector.broadcast %330 : f32 to vector<8x128xf32>
      %332 = arith.addf %329, %331 : vector<8x128xf32>
      %333 = math.tanh %332 : vector<8x128xf32>
      %c3_166 = arith.constant 3 : index
      %c20_167 = arith.constant 20 : index
      %334 = memref.load %arg5[%c3_166, %c20_167] : memref<6x32xf32, #tpu.memory_space<smem>>
      %335 = vector.broadcast %334 : f32 to vector<8x128xf32>
      %336 = arith.mulf %335, %333 : vector<8x128xf32>
      %337 = arith.addf %322, %336 : vector<8x128xf32>
      %c0_168 = arith.constant 0 : index
      %c21 = arith.constant 21 : index
      %338 = memref.load %arg5[%c0_168, %c21] : memref<6x32xf32, #tpu.memory_space<smem>>
      %339 = vector.broadcast %338 : f32 to vector<8x128xf32>
      %340 = arith.mulf %16, %339 : vector<8x128xf32>
      %c1_169 = arith.constant 1 : index
      %c21_170 = arith.constant 21 : index
      %341 = memref.load %arg5[%c1_169, %c21_170] : memref<6x32xf32, #tpu.memory_space<smem>>
      %342 = vector.broadcast %341 : f32 to vector<8x128xf32>
      %343 = arith.mulf %17, %342 : vector<8x128xf32>
      %344 = arith.addf %340, %343 : vector<8x128xf32>
      %c2_171 = arith.constant 2 : index
      %c21_172 = arith.constant 21 : index
      %345 = memref.load %arg5[%c2_171, %c21_172] : memref<6x32xf32, #tpu.memory_space<smem>>
      %346 = vector.broadcast %345 : f32 to vector<8x128xf32>
      %347 = arith.addf %344, %346 : vector<8x128xf32>
      %348 = math.tanh %347 : vector<8x128xf32>
      %c3_173 = arith.constant 3 : index
      %c21_174 = arith.constant 21 : index
      %349 = memref.load %arg5[%c3_173, %c21_174] : memref<6x32xf32, #tpu.memory_space<smem>>
      %350 = vector.broadcast %349 : f32 to vector<8x128xf32>
      %351 = arith.mulf %350, %348 : vector<8x128xf32>
      %352 = arith.addf %337, %351 : vector<8x128xf32>
      %c0_175 = arith.constant 0 : index
      %c22 = arith.constant 22 : index
      %353 = memref.load %arg5[%c0_175, %c22] : memref<6x32xf32, #tpu.memory_space<smem>>
      %354 = vector.broadcast %353 : f32 to vector<8x128xf32>
      %355 = arith.mulf %16, %354 : vector<8x128xf32>
      %c1_176 = arith.constant 1 : index
      %c22_177 = arith.constant 22 : index
      %356 = memref.load %arg5[%c1_176, %c22_177] : memref<6x32xf32, #tpu.memory_space<smem>>
      %357 = vector.broadcast %356 : f32 to vector<8x128xf32>
      %358 = arith.mulf %17, %357 : vector<8x128xf32>
      %359 = arith.addf %355, %358 : vector<8x128xf32>
      %c2_178 = arith.constant 2 : index
      %c22_179 = arith.constant 22 : index
      %360 = memref.load %arg5[%c2_178, %c22_179] : memref<6x32xf32, #tpu.memory_space<smem>>
      %361 = vector.broadcast %360 : f32 to vector<8x128xf32>
      %362 = arith.addf %359, %361 : vector<8x128xf32>
      %363 = math.tanh %362 : vector<8x128xf32>
      %c3_180 = arith.constant 3 : index
      %c22_181 = arith.constant 22 : index
      %364 = memref.load %arg5[%c3_180, %c22_181] : memref<6x32xf32, #tpu.memory_space<smem>>
      %365 = vector.broadcast %364 : f32 to vector<8x128xf32>
      %366 = arith.mulf %365, %363 : vector<8x128xf32>
      %367 = arith.addf %352, %366 : vector<8x128xf32>
      %c0_182 = arith.constant 0 : index
      %c23 = arith.constant 23 : index
      %368 = memref.load %arg5[%c0_182, %c23] : memref<6x32xf32, #tpu.memory_space<smem>>
      %369 = vector.broadcast %368 : f32 to vector<8x128xf32>
      %370 = arith.mulf %16, %369 : vector<8x128xf32>
      %c1_183 = arith.constant 1 : index
      %c23_184 = arith.constant 23 : index
      %371 = memref.load %arg5[%c1_183, %c23_184] : memref<6x32xf32, #tpu.memory_space<smem>>
      %372 = vector.broadcast %371 : f32 to vector<8x128xf32>
      %373 = arith.mulf %17, %372 : vector<8x128xf32>
      %374 = arith.addf %370, %373 : vector<8x128xf32>
      %c2_185 = arith.constant 2 : index
      %c23_186 = arith.constant 23 : index
      %375 = memref.load %arg5[%c2_185, %c23_186] : memref<6x32xf32, #tpu.memory_space<smem>>
      %376 = vector.broadcast %375 : f32 to vector<8x128xf32>
      %377 = arith.addf %374, %376 : vector<8x128xf32>
      %378 = math.tanh %377 : vector<8x128xf32>
      %c3_187 = arith.constant 3 : index
      %c23_188 = arith.constant 23 : index
      %379 = memref.load %arg5[%c3_187, %c23_188] : memref<6x32xf32, #tpu.memory_space<smem>>
      %380 = vector.broadcast %379 : f32 to vector<8x128xf32>
      %381 = arith.mulf %380, %378 : vector<8x128xf32>
      %382 = arith.addf %367, %381 : vector<8x128xf32>
      %c0_189 = arith.constant 0 : index
      %c24 = arith.constant 24 : index
      %383 = memref.load %arg5[%c0_189, %c24] : memref<6x32xf32, #tpu.memory_space<smem>>
      %384 = vector.broadcast %383 : f32 to vector<8x128xf32>
      %385 = arith.mulf %16, %384 : vector<8x128xf32>
      %c1_190 = arith.constant 1 : index
      %c24_191 = arith.constant 24 : index
      %386 = memref.load %arg5[%c1_190, %c24_191] : memref<6x32xf32, #tpu.memory_space<smem>>
      %387 = vector.broadcast %386 : f32 to vector<8x128xf32>
      %388 = arith.mulf %17, %387 : vector<8x128xf32>
      %389 = arith.addf %385, %388 : vector<8x128xf32>
      %c2_192 = arith.constant 2 : index
      %c24_193 = arith.constant 24 : index
      %390 = memref.load %arg5[%c2_192, %c24_193] : memref<6x32xf32, #tpu.memory_space<smem>>
      %391 = vector.broadcast %390 : f32 to vector<8x128xf32>
      %392 = arith.addf %389, %391 : vector<8x128xf32>
      %393 = math.tanh %392 : vector<8x128xf32>
      %c3_194 = arith.constant 3 : index
      %c24_195 = arith.constant 24 : index
      %394 = memref.load %arg5[%c3_194, %c24_195] : memref<6x32xf32, #tpu.memory_space<smem>>
      %395 = vector.broadcast %394 : f32 to vector<8x128xf32>
      %396 = arith.mulf %395, %393 : vector<8x128xf32>
      %397 = arith.addf %382, %396 : vector<8x128xf32>
      %c0_196 = arith.constant 0 : index
      %c25 = arith.constant 25 : index
      %398 = memref.load %arg5[%c0_196, %c25] : memref<6x32xf32, #tpu.memory_space<smem>>
      %399 = vector.broadcast %398 : f32 to vector<8x128xf32>
      %400 = arith.mulf %16, %399 : vector<8x128xf32>
      %c1_197 = arith.constant 1 : index
      %c25_198 = arith.constant 25 : index
      %401 = memref.load %arg5[%c1_197, %c25_198] : memref<6x32xf32, #tpu.memory_space<smem>>
      %402 = vector.broadcast %401 : f32 to vector<8x128xf32>
      %403 = arith.mulf %17, %402 : vector<8x128xf32>
      %404 = arith.addf %400, %403 : vector<8x128xf32>
      %c2_199 = arith.constant 2 : index
      %c25_200 = arith.constant 25 : index
      %405 = memref.load %arg5[%c2_199, %c25_200] : memref<6x32xf32, #tpu.memory_space<smem>>
      %406 = vector.broadcast %405 : f32 to vector<8x128xf32>
      %407 = arith.addf %404, %406 : vector<8x128xf32>
      %408 = math.tanh %407 : vector<8x128xf32>
      %c3_201 = arith.constant 3 : index
      %c25_202 = arith.constant 25 : index
      %409 = memref.load %arg5[%c3_201, %c25_202] : memref<6x32xf32, #tpu.memory_space<smem>>
      %410 = vector.broadcast %409 : f32 to vector<8x128xf32>
      %411 = arith.mulf %410, %408 : vector<8x128xf32>
      %412 = arith.addf %397, %411 : vector<8x128xf32>
      %c0_203 = arith.constant 0 : index
      %c26 = arith.constant 26 : index
      %413 = memref.load %arg5[%c0_203, %c26] : memref<6x32xf32, #tpu.memory_space<smem>>
      %414 = vector.broadcast %413 : f32 to vector<8x128xf32>
      %415 = arith.mulf %16, %414 : vector<8x128xf32>
      %c1_204 = arith.constant 1 : index
      %c26_205 = arith.constant 26 : index
      %416 = memref.load %arg5[%c1_204, %c26_205] : memref<6x32xf32, #tpu.memory_space<smem>>
      %417 = vector.broadcast %416 : f32 to vector<8x128xf32>
      %418 = arith.mulf %17, %417 : vector<8x128xf32>
      %419 = arith.addf %415, %418 : vector<8x128xf32>
      %c2_206 = arith.constant 2 : index
      %c26_207 = arith.constant 26 : index
      %420 = memref.load %arg5[%c2_206, %c26_207] : memref<6x32xf32, #tpu.memory_space<smem>>
      %421 = vector.broadcast %420 : f32 to vector<8x128xf32>
      %422 = arith.addf %419, %421 : vector<8x128xf32>
      %423 = math.tanh %422 : vector<8x128xf32>
      %c3_208 = arith.constant 3 : index
      %c26_209 = arith.constant 26 : index
      %424 = memref.load %arg5[%c3_208, %c26_209] : memref<6x32xf32, #tpu.memory_space<smem>>
      %425 = vector.broadcast %424 : f32 to vector<8x128xf32>
      %426 = arith.mulf %425, %423 : vector<8x128xf32>
      %427 = arith.addf %412, %426 : vector<8x128xf32>
      %c0_210 = arith.constant 0 : index
      %c27 = arith.constant 27 : index
      %428 = memref.load %arg5[%c0_210, %c27] : memref<6x32xf32, #tpu.memory_space<smem>>
      %429 = vector.broadcast %428 : f32 to vector<8x128xf32>
      %430 = arith.mulf %16, %429 : vector<8x128xf32>
      %c1_211 = arith.constant 1 : index
      %c27_212 = arith.constant 27 : index
      %431 = memref.load %arg5[%c1_211, %c27_212] : memref<6x32xf32, #tpu.memory_space<smem>>
      %432 = vector.broadcast %431 : f32 to vector<8x128xf32>
      %433 = arith.mulf %17, %432 : vector<8x128xf32>
      %434 = arith.addf %430, %433 : vector<8x128xf32>
      %c2_213 = arith.constant 2 : index
      %c27_214 = arith.constant 27 : index
      %435 = memref.load %arg5[%c2_213, %c27_214] : memref<6x32xf32, #tpu.memory_space<smem>>
      %436 = vector.broadcast %435 : f32 to vector<8x128xf32>
      %437 = arith.addf %434, %436 : vector<8x128xf32>
      %438 = math.tanh %437 : vector<8x128xf32>
      %c3_215 = arith.constant 3 : index
      %c27_216 = arith.constant 27 : index
      %439 = memref.load %arg5[%c3_215, %c27_216] : memref<6x32xf32, #tpu.memory_space<smem>>
      %440 = vector.broadcast %439 : f32 to vector<8x128xf32>
      %441 = arith.mulf %440, %438 : vector<8x128xf32>
      %442 = arith.addf %427, %441 : vector<8x128xf32>
      %c0_217 = arith.constant 0 : index
      %c28 = arith.constant 28 : index
      %443 = memref.load %arg5[%c0_217, %c28] : memref<6x32xf32, #tpu.memory_space<smem>>
      %444 = vector.broadcast %443 : f32 to vector<8x128xf32>
      %445 = arith.mulf %16, %444 : vector<8x128xf32>
      %c1_218 = arith.constant 1 : index
      %c28_219 = arith.constant 28 : index
      %446 = memref.load %arg5[%c1_218, %c28_219] : memref<6x32xf32, #tpu.memory_space<smem>>
      %447 = vector.broadcast %446 : f32 to vector<8x128xf32>
      %448 = arith.mulf %17, %447 : vector<8x128xf32>
      %449 = arith.addf %445, %448 : vector<8x128xf32>
      %c2_220 = arith.constant 2 : index
      %c28_221 = arith.constant 28 : index
      %450 = memref.load %arg5[%c2_220, %c28_221] : memref<6x32xf32, #tpu.memory_space<smem>>
      %451 = vector.broadcast %450 : f32 to vector<8x128xf32>
      %452 = arith.addf %449, %451 : vector<8x128xf32>
      %453 = math.tanh %452 : vector<8x128xf32>
      %c3_222 = arith.constant 3 : index
      %c28_223 = arith.constant 28 : index
      %454 = memref.load %arg5[%c3_222, %c28_223] : memref<6x32xf32, #tpu.memory_space<smem>>
      %455 = vector.broadcast %454 : f32 to vector<8x128xf32>
      %456 = arith.mulf %455, %453 : vector<8x128xf32>
      %457 = arith.addf %442, %456 : vector<8x128xf32>
      %c0_224 = arith.constant 0 : index
      %c29 = arith.constant 29 : index
      %458 = memref.load %arg5[%c0_224, %c29] : memref<6x32xf32, #tpu.memory_space<smem>>
      %459 = vector.broadcast %458 : f32 to vector<8x128xf32>
      %460 = arith.mulf %16, %459 : vector<8x128xf32>
      %c1_225 = arith.constant 1 : index
      %c29_226 = arith.constant 29 : index
      %461 = memref.load %arg5[%c1_225, %c29_226] : memref<6x32xf32, #tpu.memory_space<smem>>
      %462 = vector.broadcast %461 : f32 to vector<8x128xf32>
      %463 = arith.mulf %17, %462 : vector<8x128xf32>
      %464 = arith.addf %460, %463 : vector<8x128xf32>
      %c2_227 = arith.constant 2 : index
      %c29_228 = arith.constant 29 : index
      %465 = memref.load %arg5[%c2_227, %c29_228] : memref<6x32xf32, #tpu.memory_space<smem>>
      %466 = vector.broadcast %465 : f32 to vector<8x128xf32>
      %467 = arith.addf %464, %466 : vector<8x128xf32>
      %468 = math.tanh %467 : vector<8x128xf32>
      %c3_229 = arith.constant 3 : index
      %c29_230 = arith.constant 29 : index
      %469 = memref.load %arg5[%c3_229, %c29_230] : memref<6x32xf32, #tpu.memory_space<smem>>
      %470 = vector.broadcast %469 : f32 to vector<8x128xf32>
      %471 = arith.mulf %470, %468 : vector<8x128xf32>
      %472 = arith.addf %457, %471 : vector<8x128xf32>
      %c0_231 = arith.constant 0 : index
      %c30 = arith.constant 30 : index
      %473 = memref.load %arg5[%c0_231, %c30] : memref<6x32xf32, #tpu.memory_space<smem>>
      %474 = vector.broadcast %473 : f32 to vector<8x128xf32>
      %475 = arith.mulf %16, %474 : vector<8x128xf32>
      %c1_232 = arith.constant 1 : index
      %c30_233 = arith.constant 30 : index
      %476 = memref.load %arg5[%c1_232, %c30_233] : memref<6x32xf32, #tpu.memory_space<smem>>
      %477 = vector.broadcast %476 : f32 to vector<8x128xf32>
      %478 = arith.mulf %17, %477 : vector<8x128xf32>
      %479 = arith.addf %475, %478 : vector<8x128xf32>
      %c2_234 = arith.constant 2 : index
      %c30_235 = arith.constant 30 : index
      %480 = memref.load %arg5[%c2_234, %c30_235] : memref<6x32xf32, #tpu.memory_space<smem>>
      %481 = vector.broadcast %480 : f32 to vector<8x128xf32>
      %482 = arith.addf %479, %481 : vector<8x128xf32>
      %483 = math.tanh %482 : vector<8x128xf32>
      %c3_236 = arith.constant 3 : index
      %c30_237 = arith.constant 30 : index
      %484 = memref.load %arg5[%c3_236, %c30_237] : memref<6x32xf32, #tpu.memory_space<smem>>
      %485 = vector.broadcast %484 : f32 to vector<8x128xf32>
      %486 = arith.mulf %485, %483 : vector<8x128xf32>
      %487 = arith.addf %472, %486 : vector<8x128xf32>
      %c0_238 = arith.constant 0 : index
      %c31 = arith.constant 31 : index
      %488 = memref.load %arg5[%c0_238, %c31] : memref<6x32xf32, #tpu.memory_space<smem>>
      %489 = vector.broadcast %488 : f32 to vector<8x128xf32>
      %490 = arith.mulf %16, %489 : vector<8x128xf32>
      %c1_239 = arith.constant 1 : index
      %c31_240 = arith.constant 31 : index
      %491 = memref.load %arg5[%c1_239, %c31_240] : memref<6x32xf32, #tpu.memory_space<smem>>
      %492 = vector.broadcast %491 : f32 to vector<8x128xf32>
      %493 = arith.mulf %17, %492 : vector<8x128xf32>
      %494 = arith.addf %490, %493 : vector<8x128xf32>
      %c2_241 = arith.constant 2 : index
      %c31_242 = arith.constant 31 : index
      %495 = memref.load %arg5[%c2_241, %c31_242] : memref<6x32xf32, #tpu.memory_space<smem>>
      %496 = vector.broadcast %495 : f32 to vector<8x128xf32>
      %497 = arith.addf %494, %496 : vector<8x128xf32>
      %498 = math.tanh %497 : vector<8x128xf32>
      %c3_243 = arith.constant 3 : index
      %c31_244 = arith.constant 31 : index
      %499 = memref.load %arg5[%c3_243, %c31_244] : memref<6x32xf32, #tpu.memory_space<smem>>
      %500 = vector.broadcast %499 : f32 to vector<8x128xf32>
      %501 = arith.mulf %500, %498 : vector<8x128xf32>
      %502 = arith.addf %487, %501 : vector<8x128xf32>
      %c0_245 = arith.constant 0 : index
      %c0_246 = arith.constant 0 : index
      %503 = vector.load %arg8[%c0_245, %c0_246] : memref<8x128xf32, #tpu.memory_space<vmem>>, vector<8x128xf32>
      %cst_247 = arith.constant 8.000000e+00 : f32
      %504 = vector.broadcast %cst_247 : f32 to vector<8x128xf32>
      %505 = arith.mulf %504, %16 : vector<8x128xf32>
      %cst_248 = arith.constant 1.000000e+00 : f32
      %506 = vector.broadcast %cst_248 : f32 to vector<8x128xf32>
      %507 = arith.subf %506, %16 : vector<8x128xf32>
      %508 = arith.mulf %505, %507 : vector<8x128xf32>
      %509 = vector.broadcast %18 : f32 to vector<8x128xf32>
      %510 = arith.subf %16, %509 : vector<8x128xf32>
      %511 = arith.mulf %508, %510 : vector<8x128xf32>
      %512 = arith.subf %511, %502 : vector<8x128xf32>
      %513 = arith.addf %503, %512 : vector<8x128xf32>
      %c0_249 = arith.constant 0 : index
      %c0_250 = arith.constant 0 : index
      %514 = vector.load %arg8[%c0_249, %c0_250] : memref<8x128xf32, #tpu.memory_space<vmem>>, vector<8x128xf32>
      tpu.vector_store %arg8[%c0_249, %c0_250], %513 {strides = array<i32>} : memref<8x128xf32, #tpu.memory_space<vmem>>, vector<8x128xf32>,
      %cst_251 = arith.constant 8.000000e+00 : f32
      %515 = vector.broadcast %cst_251 : f32 to vector<8x128xf32>
      %516 = arith.mulf %515, %16 : vector<8x128xf32>
      %517 = vector.broadcast %18 : f32 to vector<8x128xf32>
      %518 = arith.subf %16, %517 : vector<8x128xf32>
      %cst_252 = arith.constant 1.000000e+00 : f32
      %519 = vector.broadcast %cst_252 : f32 to vector<8x128xf32>
      %520 = arith.subf %518, %519 : vector<8x128xf32>
      %521 = arith.mulf %516, %520 : vector<8x128xf32>
      %522 = arith.addf %521, %17 : vector<8x128xf32>
      %cst_253 = arith.constant -0.00999999977 : f32
      %523 = vector.broadcast %cst_253 : f32 to vector<8x128xf32>
      %524 = arith.mulf %523, %522 : vector<8x128xf32>
      %c0_254 = arith.constant 0 : index
      %c0_255 = arith.constant 0 : index
      %525 = vector.load %arg7[%c0_254, %c0_255] : memref<8x128xf32, #tpu.memory_space<vmem>>, vector<8x128xf32>
      tpu.vector_store %arg7[%c0_254, %c0_255], %524 {strides = array<i32>} : memref<8x128xf32, #tpu.memory_space<vmem>>, vector<8x128xf32>,
    } else {
    }
    %c0_i32_9 = arith.constant 0 : i32
    %13 = arith.cmpi eq, %arg1, %c0_i32_9 : i32
    %14 = arith.extui %13 : i1 to i32
    %c0_i32_10 = arith.constant 0 : i32
    %15 = arith.cmpi ne, %14, %c0_i32_10 : i32
    scf.if %15 {
      %c0_11 = arith.constant 0 : index
      %c0_12 = arith.constant 0 : index
      %16 = vector.load %arg8[%c0_11, %c0_12] : memref<8x128xf32, #tpu.memory_space<vmem>>, vector<8x128xf32>
      %c0_13 = arith.constant 0 : index
      %c0_14 = arith.constant 0 : index
      %17 = vector.load %arg6[%c0_13, %c0_14] : memref<8x128xf32, #tpu.memory_space<vmem>>, vector<8x128xf32>
      tpu.vector_store %arg6[%c0_13, %c0_14], %16 {strides = array<i32>} : memref<8x128xf32, #tpu.memory_space<vmem>>, vector<8x128xf32>,
    } else {
    }
    return
  }
  func.func @transform_0(%arg0: i32, %arg1: i32) -> (i32, i32) {
    %c0_i32 = arith.constant 0 : i32
    %c0_i32_0 = arith.constant 0 : i32
    return %c0_i32, %arg1 : i32, i32
  }
  func.func @transform_1(%arg0: i32, %arg1: i32) -> (i32, i32) {
    %c0_i32 = arith.constant 0 : i32
    %c0_i32_0 = arith.constant 0 : i32
    return %c0_i32, %arg0 : i32, i32
  }
  func.func @transform_2(%arg0: i32, %arg1: i32) -> (i32, i32) {
    %c0_i32 = arith.constant 0 : i32
    return %arg1, %arg0 : i32, i32
  }
  func.func @transform_3(%arg0: i32, %arg1: i32) -> (i32, i32) {
    %c0_i32 = arith.constant 0 : i32
    %c0_i32_0 = arith.constant 0 : i32
    %c0_i32_1 = arith.constant 0 : i32
    return %c0_i32, %c0_i32_0 : i32, i32
  }
  func.func @transform_4(%arg0: i32, %arg1: i32) -> (i32, i32) {
    %c0_i32 = arith.constant 0 : i32
    %c0_i32_0 = arith.constant 0 : i32
    return %c0_i32, %arg0 : i32, i32
  }
  func.func @transform_5(%arg0: i32, %arg1: i32) -> (i32, i32) {
    %c0_i32 = arith.constant 0 : i32
    %c0_i32_0 = arith.constant 0 : i32
    return %c0_i32, %arg0 : i32, i32
  }
}

</mosaic_0001>

<llo_original>
// kernel: apmodel_uv_forward.1
$region0: #{apmodel_uv_forward.1}
  #allocation0 [shape = 'u32[]', space=smem, size = 0x4, offset = 0x4, fixed_abs, tag = 'smem constant byte address 0x4 - core index']
  #allocation1 [shape = 'u32[72,128]{1,0:T(1,128)}', space=vmem, size = 0x9000, scoped, tag = 'internal scratch']
  #allocation2 [shape = 'f32[8,128]{1,0:T(8,128)}', space=vmem, size = 0x1000, scoped, tag = 'scratch operand']
  %s0 = inlined_call_operand.vmem [shape: f32[8,128], index: 0, kind: input, shape index: {}]
  %s1 = inlined_call_operand.vmem [shape: f32[8,128], index: 1, kind: input, shape index: {}]
  %s2 = inlined_call_operand.hbm [shape: bf16[128,128], index: 2, kind: input, shape index: {}]
  %s3 = inlined_call_operand.vmem [shape: f32[6,32], index: 3, kind: input, shape index: {}]
  %s4 = inlined_call_operand.vmem [shape: f32[8,128], index: 4, kind: output, shape index: {0}]
  %s5 = inlined_call_operand.vmem [shape: f32[8,128], index: 5, kind: output, shape index: {1}]
  %6 = xla_tuple %s4, %s5
  %s7 = sld [smem:[#allocation0]]
  $region54: #{apmodel_uv_forward.1} parent=0
    _
  %s9 = ssub.s32 1, %s7
  %s10 = scalar_select 0, %s9, %s7
  $region1: #{apmodel_uv_forward.1} parent=0
    #allocation3 [shape = 'u8[32768]{0}', space=vmem, size = 0x8000, scoped, tag = 'input window, operand 2, single buffered']
    #allocation4 [shape = 's32[1]{0}', space=sflag, size = 0x4, scoped, tag = 'scoped memory for apmodel_uv_forward.1']
    #allocation5 [shape = 's32[1]{0}', space=sflag, size = 0x4, scoped, tag = 'scoped memory for apmodel_uv_forward.1']
    #allocation6 [shape = 'u8[4096]{0}', space=smem, size = 0x1000, scoped, tag = 'input window, operand 3, single buffered']
    %11 = vsyncpa [#allocation4], 0
    %12 = vsyncpa [#allocation5], 0
    // Predicated region
    $region2: #{apmodel_uv_forward.1} parent=1 // pred_check
      _
    $region3: #{apmodel_uv_forward.1} parent=1 // pred_check_branch
      %14 = sbr.rel (0) target = $region5
    $region4: #{apmodel_uv_forward.1} parent=1 // pred_region
      _
    $region5: #{apmodel_uv_forward.1} parent=1 // pred_fallthru
      _
    // Predicated region
    $region6: #{apmodel_uv_forward.1} parent=1 // pred_check
      _
    $region7: #{apmodel_uv_forward.1} parent=1 // pred_check_branch
      %16 = sbr.rel (0) target = $region9
    $region8: #{apmodel_uv_forward.1} parent=1 // pred_region
      _
    $region9: #{apmodel_uv_forward.1} parent=1 // pred_fallthru
      _
    // Predicated region
    $region10: #{apmodel_uv_forward.1} parent=1 // pred_check
      _
    $region11: #{apmodel_uv_forward.1} parent=1 // pred_check_branch
      %18 = sbr.rel (0) target = $region13
    $region12: #{apmodel_uv_forward.1} parent=1 // pred_region
      %20 = vsyncadd [#allocation4], 0
      %s21 = sshll.u32 %s2, 4
      %s22 = int_to_ptr.hbm [resolvable:$true] %s21
      %s23 = sshll.u32 [#allocation3], 4
      %s24 = int_to_ptr.vmem [resolvable:$true] %s23
      %29 = dma.hbm_to_vmem [thread:$0]  %s22, 1024, %s24, [#allocation4], 64, 64, 4
    $region13: #{apmodel_uv_forward.1} parent=1 // pred_fallthru
      _
    // Predicated region
    $region14: #{apmodel_uv_forward.1} parent=1 // pred_check
      _
    $region15: #{apmodel_uv_forward.1} parent=1 // pred_check_branch
      %31 = sbr.rel (0) target = $region17
    $region16: #{apmodel_uv_forward.1} parent=1 // pred_region
      %33 = vsyncadd [#allocation5], 0
      %s35 = sshll.u32 %s3, 4
      %s36 = int_to_ptr.vmem [resolvable:$true] %s35
      %38 = dma.vmem_to_smem %s36, 128, [#allocation6], [#allocation5]
    $region17: #{apmodel_uv_forward.1} parent=1 // pred_fallthru
      _
    // Predicated region
    $region18: #{apmodel_uv_forward.1} parent=1 // pred_check
      _
    $region19: #{apmodel_uv_forward.1} parent=1 // pred_check_branch
      %40 = sbr.rel (0) target = $region21
    $region20: #{apmodel_uv_forward.1} parent=1 // pred_region
      %42 = dma.done [#allocation4], 1024
    $region21: #{apmodel_uv_forward.1} parent=1 // pred_fallthru
      _
    // Predicated region
    $region22: #{apmodel_uv_forward.1} parent=1 // pred_check
      _
    $region23: #{apmodel_uv_forward.1} parent=1 // pred_check_branch
      %44 = sbr.rel (0) target = $region25
    $region24: #{apmodel_uv_forward.1} parent=1 // pred_region
      %46 = dma.done [#allocation5], 128
    $region25: #{apmodel_uv_forward.1} parent=1 // pred_fallthru
      _
    %47 = sfence
    %p48 = scmp.eq.s32.totalorder 0, 0
    // Predicated region
    $region26: #{apmodel_uv_forward.1} parent=1 // pred_check
      %p49 = pneg %p48
    $region27: #{apmodel_uv_forward.1} parent=1 // pred_check_branch
      %51 = sbr.rel (%p49) target = $region29
    $region28: #{apmodel_uv_forward.1} parent=1 // pred_region
      %52 = vst [vmem:[#allocation2] sm:$0xff] 0.0
    $region29: #{apmodel_uv_forward.1} parent=1 // pred_fallthru
      _
    %v53 = vld [vmem:[#allocation2] sm:$0xff]
    %v54 = vld [vmem:[%s0] sm:$0xff]
    %v55 = vpack.c.bf16 %v54, %v54
    %v56 = vld [vmem:[#allocation3] sm:$0xf]
    %v57 = vld [vmem:[#allocation3 + $0x4] sm:$0xf]
    %v58 = vld [vmem:[#allocation3 + $0x8] sm:$0xf]
    %v59 = vld [vmem:[#allocation3 + $0xc] sm:$0xf]
    %v60 = vld [vmem:[#allocation3 + $0x10] sm:$0xf]
    %v61 = vld [vmem:[#allocation3 + $0x14] sm:$0xf]
    %v62 = vld [vmem:[#allocation3 + $0x18] sm:$0xf]
    %v63 = vld [vmem:[#allocation3 + $0x1c] sm:$0xf]
    %v64 = vld [vmem:[#allocation3 + $0x20] sm:$0xf]
    %v65 = vld [vmem:[#allocation3 + $0x24] sm:$0xf]
    %v66 = vld [vmem:[#allocation3 + $0x28] sm:$0xf]
    %v67 = vld [vmem:[#allocation3 + $0x2c] sm:$0xf]
    %v68 = vld [vmem:[#allocation3 + $0x30] sm:$0xf]
    %v69 = vld [vmem:[#allocation3 + $0x34] sm:$0xf]
    %v70 = vld [vmem:[#allocation3 + $0x38] sm:$0xf]
    %v71 = vld [vmem:[#allocation3 + $0x3c] sm:$0xf]
    %v88 = vunpack.c.l.b16 %v56
    %v89 = vunpack.c.l.b16 %v57
    %v90 = vunpack.c.l.b16 %v58
    %v91 = vunpack.c.l.b16 %v59
    %v92 = vunpack.c.l.b16 %v60
    %v93 = vunpack.c.l.b16 %v61
    %v94 = vunpack.c.l.b16 %v62
    %v95 = vunpack.c.l.b16 %v63
    %v96 = vunpack.c.l.b16 %v64
    %v97 = vunpack.c.l.b16 %v65
    %v98 = vunpack.c.l.b16 %v66
    %v99 = vunpack.c.l.b16 %v67
    %v100 = vunpack.c.l.b16 %v68
    %v101 = vunpack.c.l.b16 %v69
    %v102 = vunpack.c.l.b16 %v70
    %v103 = vunpack.c.l.b16 %v71
    %v104 = vpack.c.b16 %v89, %v88
    %v105 = vpack.c.b16 %v91, %v90
    %v106 = vpack.c.b16 %v93, %v92
    %v107 = vpack.c.b16 %v95, %v94
    %v108 = vpack.c.b16 %v97, %v96
    %v109 = vpack.c.b16 %v99, %v98
    %v110 = vpack.c.b16 %v101, %v100
    %v111 = vpack.c.b16 %v103, %v102
    %120 = vmatpush.bf16.msra.mxu0 %v111
    %121 = vmatpush.bf16.msra.mxu0 %v110
    %122 = vmatpush.bf16.msra.mxu0 %v109
    %123 = vmatpush.bf16.msra.mxu0 %v108
    %124 = vmatpush.bf16.msra.mxu0 %v107
    %125 = vmatpush.bf16.msra.mxu0 %v106
    %126 = vmatpush.bf16.msra.mxu0 %v105
    %127 = vmatpush.bf16.msra.mxu0 %v104
    %128 = vmatmul.bf16.gmra.mxu0 %v55
    %v129 = vpop.f32.mrf.mxu0
    %v130 = vadd.f32 0.0, %v129
    %v131 = vpop.f32.mrf.mxu0
    %132 = vdwg.mxu0
    %v133 = vadd.f32 %v53, %v130
    %134 = vst [vmem:[#allocation2] sm:$0xff] %v133
    %p135 = scmp.eq.s32.totalorder 0, 0
    // Predicated region
    $region30: #{apmodel_uv_forward.1} parent=1 // pred_check
      %p136 = pneg %p135
    $region31: #{apmodel_uv_forward.1} parent=1 // pred_check_branch
      %138 = sbr.rel (%p136) target = $region33
    $region32: #{apmodel_uv_forward.1} parent=1 // pred_region
      %v139 = vld [vmem:[%s0] sm:$0xff]
      %v140 = vld [vmem:[%s1] sm:$0xff]
      %s141 = sld [smem:[#allocation6 + $0x280]]
      %s142 = sld [smem:[#allocation6 + $0x200]]
      %v143 = vstv %s142
      %v144 = vadd.f32 %v143, 0.0
      %s145 = sld [smem:[#allocation6]]
      %v146 = vstv %s145
      %v147 = vmul.f32 %v139, %v146
      %s148 = sld [smem:[#allocation6 + $0x80]]
      %v149 = vstv %s148
      %v150 = vmul.f32 %v140, %v149
      %v151 = vadd.f32 %v147, %v150
      %s152 = sld [smem:[#allocation6 + $0x100]]
      %v153 = vstv %s152
      %v154 = vadd.f32 %v151, %v153
      %v155 = vtanh.pop %v154
      %s156 = sld [smem:[#allocation6 + $0x180]]
      %v157 = vstv %s156
      %v158 = vmul.f32 %v157, %v155
      %v159 = vadd.f32 %v144, %v158
      %s160 = sld [smem:[#allocation6 + $0x1]]
      %v161 = vstv %s160
      %v162 = vmul.f32 %v139, %v161
      %s163 = sld [smem:[#allocation6 + $0x81]]
      %v164 = vstv %s163
      %v165 = vmul.f32 %v140, %v164
      %v166 = vadd.f32 %v162, %v165
      %s167 = sld [smem:[#allocation6 + $0x101]]
      %v168 = vstv %s167
      %v169 = vadd.f32 %v166, %v168
      %v170 = vtanh.pop %v169
      %s171 = sld [smem:[#allocation6 + $0x181]]
      %v172 = vstv %s171
      %v173 = vmul.f32 %v172, %v170
      %v174 = vadd.f32 %v159, %v173
      %s175 = sld [smem:[#allocation6 + $0x2]]
      %v176 = vstv %s175
      %v177 = vmul.f32 %v139, %v176
      %s178 = sld [smem:[#allocation6 + $0x82]]
      %v179 = vstv %s178
      %v180 = vmul.f32 %v140, %v179
      %v181 = vadd.f32 %v177, %v180
      %s182 = sld [smem:[#allocation6 + $0x102]]
      %v183 = vstv %s182
      %v184 = vadd.f32 %v181, %v183
      %v185 = vtanh.pop %v184
      %s186 = sld [smem:[#allocation6 + $0x182]]
      %v187 = vstv %s186
      %v188 = vmul.f32 %v187, %v185
      %v189 = vadd.f32 %v174, %v188
      %s190 = sld [smem:[#allocation6 + $0x3]]
      %v191 = vstv %s190
      %v192 = vmul.f32 %v139, %v191
      %s193 = sld [smem:[#allocation6 + $0x83]]
      %v194 = vstv %s193
      %v195 = vmul.f32 %v140, %v194
      %v196 = vadd.f32 %v192, %v195
      %s197 = sld [smem:[#allocation6 + $0x103]]
      %v198 = vstv %s197
      %v199 = vadd.f32 %v196, %v198
      %v200 = vtanh.pop %v199
      %s201 = sld [smem:[#allocation6 + $0x183]]
      %v202 = vstv %s201
      %v203 = vmul.f32 %v202, %v200
      %v204 = vadd.f32 %v189, %v203
      %s205 = sld [smem:[#allocation6 + $0x4]]
      %v206 = vstv %s205
      %v207 = vmul.f32 %v139, %v206
      %s208 = sld [smem:[#allocation6 + $0x84]]
      %v209 = vstv %s208
      %v210 = vmul.f32 %v140, %v209
      %v211 = vadd.f32 %v207, %v210
      %s212 = sld [smem:[#allocation6 + $0x104]]
      %v213 = vstv %s212
      %v214 = vadd.f32 %v211, %v213
      %v215 = vtanh.pop %v214
      %s216 = sld [smem:[#allocation6 + $0x184]]
      %v217 = vstv %s216
      %v218 = vmul.f32 %v217, %v215
      %v219 = vadd.f32 %v204, %v218
      %s220 = sld [smem:[#allocation6 + $0x5]]
      %v221 = vstv %s220
      %v222 = vmul.f32 %v139, %v221
      %s223 = sld [smem:[#allocation6 + $0x85]]
      %v224 = vstv %s223
      %v225 = vmul.f32 %v140, %v224
      %v226 = vadd.f32 %v222, %v225
      %s227 = sld [smem:[#allocation6 + $0x105]]
      %v228 = vstv %s227
      %v229 = vadd.f32 %v226, %v228
      %v230 = vtanh.pop %v229
      %s231 = sld [smem:[#allocation6 + $0x185]]
      %v232 = vstv %s231
      %v233 = vmul.f32 %v232, %v230
      %v234 = vadd.f32 %v219, %v233
      %s235 = sld [smem:[#allocation6 + $0x6]]
      %v236 = vstv %s235
      %v237 = vmul.f32 %v139, %v236
      %s238 = sld [smem:[#allocation6 + $0x86]]
      %v239 = vstv %s238
      %v240 = vmul.f32 %v140, %v239
      %v241 = vadd.f32 %v237, %v240
      %s242 = sld [smem:[#allocation6 + $0x106]]
      %v243 = vstv %s242
      %v244 = vadd.f32 %v241, %v243
      %v245 = vtanh.pop %v244
      %s246 = sld [smem:[#allocation6 + $0x186]]
      %v247 = vstv %s246
      %v248 = vmul.f32 %v247, %v245
      %v249 = vadd.f32 %v234, %v248
      %s250 = sld [smem:[#allocation6 + $0x7]]
      %v251 = vstv %s250
      %v252 = vmul.f32 %v139, %v251
      %s253 = sld [smem:[#allocation6 + $0x87]]
      %v254 = vstv %s253
      %v255 = vmul.f32 %v140, %v254
      %v256 = vadd.f32 %v252, %v255
      %s257 = sld [smem:[#allocation6 + $0x107]]
      %v258 = vstv %s257
      %v259 = vadd.f32 %v256, %v258
      %v260 = vtanh.pop %v259
      %s261 = sld [smem:[#allocation6 + $0x187]]
      %v262 = vstv %s261
      %v263 = vmul.f32 %v262, %v260
      %v264 = vadd.f32 %v249, %v263
      %s265 = sld [smem:[#allocation6 + $0x8]]
      %v266 = vstv %s265
      %v267 = vmul.f32 %v139, %v266
      %s268 = sld [smem:[#allocation6 + $0x88]]
      %v269 = vstv %s268
      %v270 = vmul.f32 %v140, %v269
      %v271 = vadd.f32 %v267, %v270
      %s272 = sld [smem:[#allocation6 + $0x108]]
      %v273 = vstv %s272
      %v274 = vadd.f32 %v271, %v273
      %v275 = vtanh.pop %v274
      %s276 = sld [smem:[#allocation6 + $0x188]]
      %v277 = vstv %s276
      %v278 = vmul.f32 %v277, %v275
      %v279 = vadd.f32 %v264, %v278
      %s280 = sld [smem:[#allocation6 + $0x9]]
      %v281 = vstv %s280
      %v282 = vmul.f32 %v139, %v281
      %s283 = sld [smem:[#allocation6 + $0x89]]
      %v284 = vstv %s283
      %v285 = vmul.f32 %v140, %v284
      %v286 = vadd.f32 %v282, %v285
      %s287 = sld [smem:[#allocation6 + $0x109]]
      %v288 = vstv %s287
      %v289 = vadd.f32 %v286, %v288
      %v290 = vtanh.pop %v289
      %s291 = sld [smem:[#allocation6 + $0x189]]
      %v292 = vstv %s291
      %v293 = vmul.f32 %v292, %v290
      %v294 = vadd.f32 %v279, %v293
      %s295 = sld [smem:[#allocation6 + $0xa]]
      %v296 = vstv %s295
      %v297 = vmul.f32 %v139, %v296
      %s298 = sld [smem:[#allocation6 + $0x8a]]
      %v299 = vstv %s298
      %v300 = vmul.f32 %v140, %v299
      %v301 = vadd.f32 %v297, %v300
      %s302 = sld [smem:[#allocation6 + $0x10a]]
      %v303 = vstv %s302
      %v304 = vadd.f32 %v301, %v303
      %v305 = vtanh.pop %v304
      %s306 = sld [smem:[#allocation6 + $0x18a]]
      %v307 = vstv %s306
      %v308 = vmul.f32 %v307, %v305
      %v309 = vadd.f32 %v294, %v308
      %s310 = sld [smem:[#allocation6 + $0xb]]
      %v311 = vstv %s310
      %v312 = vmul.f32 %v139, %v311
      %s313 = sld [smem:[#allocation6 + $0x8b]]
      %v314 = vstv %s313
      %v315 = vmul.f32 %v140, %v314
      %v316 = vadd.f32 %v312, %v315
      %s317 = sld [smem:[#allocation6 + $0x10b]]
      %v318 = vstv %s317
      %v319 = vadd.f32 %v316, %v318
      %v320 = vtanh.pop %v319
      %s321 = sld [smem:[#allocation6 + $0x18b]]
      %v322 = vstv %s321
      %v323 = vmul.f32 %v322, %v320
      %v324 = vadd.f32 %v309, %v323
      %s325 = sld [smem:[#allocation6 + $0xc]]
      %v326 = vstv %s325
      %v327 = vmul.f32 %v139, %v326
      %s328 = sld [smem:[#allocation6 + $0x8c]]
      %v329 = vstv %s328
      %v330 = vmul.f32 %v140, %v329
      %v331 = vadd.f32 %v327, %v330
      %s332 = sld [smem:[#allocation6 + $0x10c]]
      %v333 = vstv %s332
      %v334 = vadd.f32 %v331, %v333
      %v335 = vtanh.pop %v334
      %s336 = sld [smem:[#allocation6 + $0x18c]]
      %v337 = vstv %s336
      %v338 = vmul.f32 %v337, %v335
      %v339 = vadd.f32 %v324, %v338
      %s340 = sld [smem:[#allocation6 + $0xd]]
      %v341 = vstv %s340
      %v342 = vmul.f32 %v139, %v341
      %s343 = sld [smem:[#allocation6 + $0x8d]]
      %v344 = vstv %s343
      %v345 = vmul.f32 %v140, %v344
      %v346 = vadd.f32 %v342, %v345
      %s347 = sld [smem:[#allocation6 + $0x10d]]
      %v348 = vstv %s347
      %v349 = vadd.f32 %v346, %v348
      %v350 = vtanh.pop %v349
      %s351 = sld [smem:[#allocation6 + $0x18d]]
      %v352 = vstv %s351
      %v353 = vmul.f32 %v352, %v350
      %v354 = vadd.f32 %v339, %v353
      %s355 = sld [smem:[#allocation6 + $0xe]]
      %v356 = vstv %s355
      %v357 = vmul.f32 %v139, %v356
      %s358 = sld [smem:[#allocation6 + $0x8e]]
      %v359 = vstv %s358
      %v360 = vmul.f32 %v140, %v359
      %v361 = vadd.f32 %v357, %v360
      %s362 = sld [smem:[#allocation6 + $0x10e]]
      %v363 = vstv %s362
      %v364 = vadd.f32 %v361, %v363
      %v365 = vtanh.pop %v364
      %s366 = sld [smem:[#allocation6 + $0x18e]]
      %v367 = vstv %s366
      %v368 = vmul.f32 %v367, %v365
      %v369 = vadd.f32 %v354, %v368
      %s370 = sld [smem:[#allocation6 + $0xf]]
      %v371 = vstv %s370
      %v372 = vmul.f32 %v139, %v371
      %s373 = sld [smem:[#allocation6 + $0x8f]]
      %v374 = vstv %s373
      %v375 = vmul.f32 %v140, %v374
      %v376 = vadd.f32 %v372, %v375
      %s377 = sld [smem:[#allocation6 + $0x10f]]
      %v378 = vstv %s377
      %v379 = vadd.f32 %v376, %v378
      %v380 = vtanh.pop %v379
      %s381 = sld [smem:[#allocation6 + $0x18f]]
      %v382 = vstv %s381
      %v383 = vmul.f32 %v382, %v380
      %v384 = vadd.f32 %v369, %v383
      %s385 = sld [smem:[#allocation6 + $0x10]]
      %v386 = vstv %s385
      %v387 = vmul.f32 %v139, %v386
      %s388 = sld [smem:[#allocation6 + $0x90]]
      %v389 = vstv %s388
      %v390 = vmul.f32 %v140, %v389
      %v391 = vadd.f32 %v387, %v390
      %s392 = sld [smem:[#allocation6 + $0x110]]
      %v393 = vstv %s392
      %v394 = vadd.f32 %v391, %v393
      %v395 = vtanh.pop %v394
      %s396 = sld [smem:[#allocation6 + $0x190]]
      %v397 = vstv %s396
      %v398 = vmul.f32 %v397, %v395
      %v399 = vadd.f32 %v384, %v398
      %s400 = sld [smem:[#allocation6 + $0x11]]
      %v401 = vstv %s400
      %v402 = vmul.f32 %v139, %v401
      %s403 = sld [smem:[#allocation6 + $0x91]]
      %v404 = vstv %s403
      %v405 = vmul.f32 %v140, %v404
      %v406 = vadd.f32 %v402, %v405
      %s407 = sld [smem:[#allocation6 + $0x111]]
      %v408 = vstv %s407
      %v409 = vadd.f32 %v406, %v408
      %v410 = vtanh.pop %v409
      %s411 = sld [smem:[#allocation6 + $0x191]]
      %v412 = vstv %s411
      %v413 = vmul.f32 %v412, %v410
      %v414 = vadd.f32 %v399, %v413
      %s415 = sld [smem:[#allocation6 + $0x12]]
      %v416 = vstv %s415
      %v417 = vmul.f32 %v139, %v416
      %s418 = sld [smem:[#allocation6 + $0x92]]
      %v419 = vstv %s418
      %v420 = vmul.f32 %v140, %v419
      %v421 = vadd.f32 %v417, %v420
      %s422 = sld [smem:[#allocation6 + $0x112]]
      %v423 = vstv %s422
      %v424 = vadd.f32 %v421, %v423
      %v425 = vtanh.pop %v424
      %s426 = sld [smem:[#allocation6 + $0x192]]
      %v427 = vstv %s426
      %v428 = vmul.f32 %v427, %v425
      %v429 = vadd.f32 %v414, %v428
      %s430 = sld [smem:[#allocation6 + $0x13]]
      %v431 = vstv %s430
      %v432 = vmul.f32 %v139, %v431
      %s433 = sld [smem:[#allocation6 + $0x93]]
      %v434 = vstv %s433
      %v435 = vmul.f32 %v140, %v434
      %v436 = vadd.f32 %v432, %v435
      %s437 = sld [smem:[#allocation6 + $0x113]]
      %v438 = vstv %s437
      %v439 = vadd.f32 %v436, %v438
      %v440 = vtanh.pop %v439
      %s441 = sld [smem:[#allocation6 + $0x193]]
      %v442 = vstv %s441
      %v443 = vmul.f32 %v442, %v440
      %v444 = vadd.f32 %v429, %v443
      %s445 = sld [smem:[#allocation6 + $0x14]]
      %v446 = vstv %s445
      %v447 = vmul.f32 %v139, %v446
      %s448 = sld [smem:[#allocation6 + $0x94]]
      %v449 = vstv %s448
      %v450 = vmul.f32 %v140, %v449
      %v451 = vadd.f32 %v447, %v450
      %s452 = sld [smem:[#allocation6 + $0x114]]
      %v453 = vstv %s452
      %v454 = vadd.f32 %v451, %v453
      %v455 = vtanh.pop %v454
      %s456 = sld [smem:[#allocation6 + $0x194]]
      %v457 = vstv %s456
      %v458 = vmul.f32 %v457, %v455
      %v459 = vadd.f32 %v444, %v458
      %s460 = sld [smem:[#allocation6 + $0x15]]
      %v461 = vstv %s460
      %v462 = vmul.f32 %v139, %v461
      %s463 = sld [smem:[#allocation6 + $0x95]]
      %v464 = vstv %s463
      %v465 = vmul.f32 %v140, %v464
      %v466 = vadd.f32 %v462, %v465
      %s467 = sld [smem:[#allocation6 + $0x115]]
      %v468 = vstv %s467
      %v469 = vadd.f32 %v466, %v468
      %v470 = vtanh.pop %v469
      %s471 = sld [smem:[#allocation6 + $0x195]]
      %v472 = vstv %s471
      %v473 = vmul.f32 %v472, %v470
      %v474 = vadd.f32 %v459, %v473
      %s475 = sld [smem:[#allocation6 + $0x16]]
      %v476 = vstv %s475
      %v477 = vmul.f32 %v139, %v476
      %s478 = sld [smem:[#allocation6 + $0x96]]
      %v479 = vstv %s478
      %v480 = vmul.f32 %v140, %v479
      %v481 = vadd.f32 %v477, %v480
      %s482 = sld [smem:[#allocation6 + $0x116]]
      %v483 = vstv %s482
      %v484 = vadd.f32 %v481, %v483
      %v485 = vtanh.pop %v484
      %s486 = sld [smem:[#allocation6 + $0x196]]
      %v487 = vstv %s486
      %v488 = vmul.f32 %v487, %v485
      %v489 = vadd.f32 %v474, %v488
      %s490 = sld [smem:[#allocation6 + $0x17]]
      %v491 = vstv %s490
      %v492 = vmul.f32 %v139, %v491
      %s493 = sld [smem:[#allocation6 + $0x97]]
      %v494 = vstv %s493
      %v495 = vmul.f32 %v140, %v494
      %v496 = vadd.f32 %v492, %v495
      %s497 = sld [smem:[#allocation6 + $0x117]]
      %v498 = vstv %s497
      %v499 = vadd.f32 %v496, %v498
      %v500 = vtanh.pop %v499
      %s501 = sld [smem:[#allocation6 + $0x197]]
      %v502 = vstv %s501
      %v503 = vmul.f32 %v502, %v500
      %v504 = vadd.f32 %v489, %v503
      %s505 = sld [smem:[#allocation6 + $0x18]]
      %v506 = vstv %s505
      %v507 = vmul.f32 %v139, %v506
      %s508 = sld [smem:[#allocation6 + $0x98]]
      %v509 = vstv %s508
      %v510 = vmul.f32 %v140, %v509
      %v511 = vadd.f32 %v507, %v510
      %s512 = sld [smem:[#allocation6 + $0x118]]
      %v513 = vstv %s512
      %v514 = vadd.f32 %v511, %v513
      %v515 = vtanh.pop %v514
      %s516 = sld [smem:[#allocation6 + $0x198]]
      %v517 = vstv %s516
      %v518 = vmul.f32 %v517, %v515
      %v519 = vadd.f32 %v504, %v518
      %s520 = sld [smem:[#allocation6 + $0x19]]
      %v521 = vstv %s520
      %v522 = vmul.f32 %v139, %v521
      %s523 = sld [smem:[#allocation6 + $0x99]]
      %v524 = vstv %s523
      %v525 = vmul.f32 %v140, %v524
      %v526 = vadd.f32 %v522, %v525
      %s527 = sld [smem:[#allocation6 + $0x119]]
      %v528 = vstv %s527
      %v529 = vadd.f32 %v526, %v528
      %v530 = vtanh.pop %v529
      %s531 = sld [smem:[#allocation6 + $0x199]]
      %v532 = vstv %s531
      %v533 = vmul.f32 %v532, %v530
      %v534 = vadd.f32 %v519, %v533
      %s535 = sld [smem:[#allocation6 + $0x1a]]
      %v536 = vstv %s535
      %v537 = vmul.f32 %v139, %v536
      %s538 = sld [smem:[#allocation6 + $0x9a]]
      %v539 = vstv %s538
      %v540 = vmul.f32 %v140, %v539
      %v541 = vadd.f32 %v537, %v540
      %s542 = sld [smem:[#allocation6 + $0x11a]]
      %v543 = vstv %s542
      %v544 = vadd.f32 %v541, %v543
      %v545 = vtanh.pop %v544
      %s546 = sld [smem:[#allocation6 + $0x19a]]
      %v547 = vstv %s546
      %v548 = vmul.f32 %v547, %v545
      %v549 = vadd.f32 %v534, %v548
      %s550 = sld [smem:[#allocation6 + $0x1b]]
      %v551 = vstv %s550
      %v552 = vmul.f32 %v139, %v551
      %s553 = sld [smem:[#allocation6 + $0x9b]]
      %v554 = vstv %s553
      %v555 = vmul.f32 %v140, %v554
      %v556 = vadd.f32 %v552, %v555
      %s557 = sld [smem:[#allocation6 + $0x11b]]
      %v558 = vstv %s557
      %v559 = vadd.f32 %v556, %v558
      %v560 = vtanh.pop %v559
      %s561 = sld [smem:[#allocation6 + $0x19b]]
      %v562 = vstv %s561
      %v563 = vmul.f32 %v562, %v560
      %v564 = vadd.f32 %v549, %v563
      %s565 = sld [smem:[#allocation6 + $0x1c]]
      %v566 = vstv %s565
      %v567 = vmul.f32 %v139, %v566
      %s568 = sld [smem:[#allocation6 + $0x9c]]
      %v569 = vstv %s568
      %v570 = vmul.f32 %v140, %v569
      %v571 = vadd.f32 %v567, %v570
      %s572 = sld [smem:[#allocation6 + $0x11c]]
      %v573 = vstv %s572
      %v574 = vadd.f32 %v571, %v573
      %v575 = vtanh.pop %v574
      %s576 = sld [smem:[#allocation6 + $0x19c]]
      %v577 = vstv %s576
      %v578 = vmul.f32 %v577, %v575
      %v579 = vadd.f32 %v564, %v578
      %s580 = sld [smem:[#allocation6 + $0x1d]]
      %v581 = vstv %s580
      %v582 = vmul.f32 %v139, %v581
      %s583 = sld [smem:[#allocation6 + $0x9d]]
      %v584 = vstv %s583
      %v585 = vmul.f32 %v140, %v584
      %v586 = vadd.f32 %v582, %v585
      %s587 = sld [smem:[#allocation6 + $0x11d]]
      %v588 = vstv %s587
      %v589 = vadd.f32 %v586, %v588
      %v590 = vtanh.pop %v589
      %s591 = sld [smem:[#allocation6 + $0x19d]]
      %v592 = vstv %s591
      %v593 = vmul.f32 %v592, %v590
      %v594 = vadd.f32 %v579, %v593
      %s595 = sld [smem:[#allocation6 + $0x1e]]
      %v596 = vstv %s595
      %v597 = vmul.f32 %v139, %v596
      %s598 = sld [smem:[#allocation6 + $0x9e]]
      %v599 = vstv %s598
      %v600 = vmul.f32 %v140, %v599
      %v601 = vadd.f32 %v597, %v600
      %s602 = sld [smem:[#allocation6 + $0x11e]]
      %v603 = vstv %s602
      %v604 = vadd.f32 %v601, %v603
      %v605 = vtanh.pop %v604
      %s606 = sld [smem:[#allocation6 + $0x19e]]
      %v607 = vstv %s606
      %v608 = vmul.f32 %v607, %v605
      %v609 = vadd.f32 %v594, %v608
      %s610 = sld [smem:[#allocation6 + $0x1f]]
      %v611 = vstv %s610
      %v612 = vmul.f32 %v139, %v611
      %s613 = sld [smem:[#allocation6 + $0x9f]]
      %v614 = vstv %s613
      %v615 = vmul.f32 %v140, %v614
      %v616 = vadd.f32 %v612, %v615
      %s617 = sld [smem:[#allocation6 + $0x11f]]
      %v618 = vstv %s617
      %v619 = vadd.f32 %v616, %v618
      %v620 = vtanh.pop %v619
      %s621 = sld [smem:[#allocation6 + $0x19f]]
      %v622 = vstv %s621
      %v623 = vmul.f32 %v622, %v620
      %v624 = vadd.f32 %v609, %v623
      %v625 = vld [vmem:[#allocation2] sm:$0xff]
      %v626 = vmul.f32 %v139, 8.0
      %v627 = vsub.f32 1.0, %v139
      %v628 = vmul.f32 %v626, %v627
      %v629 = vstv %s141
      %v630 = vsub.f32 %v139, %v629
      %v631 = vmul.f32 %v628, %v630
      %v632 = vsub.f32 %v631, %v624
      %v633 = vadd.f32 %v625, %v632
      %634 = vst [vmem:[#allocation2] sm:$0xff] %v633
      %v635 = vsub.f32 %v630, 1.0
      %v636 = vmul.f32 %v626, %v635
      %v637 = vadd.f32 %v636, %v140
      %v638 = vmul.f32 %v637, -0.01
      %639 = vst [vmem:[%s5] sm:$0xff] %v638
    $region33: #{apmodel_uv_forward.1} parent=1 // pred_fallthru
      _
    // Predicated region
    $region34: #{apmodel_uv_forward.1} parent=1 // pred_check
      %p640 = pneg %p48
    $region35: #{apmodel_uv_forward.1} parent=1 // pred_check_branch
      %642 = sbr.rel (%p640) target = $region37
    $region36: #{apmodel_uv_forward.1} parent=1 // pred_region
      %v643 = vld [vmem:[#allocation2] sm:$0xff]
      %644 = vst [vmem:[%s4] sm:$0xff] %v643
    $region37: #{apmodel_uv_forward.1} parent=1 // pred_fallthru
      _
    // Predicated region
    $region38: #{apmodel_uv_forward.1} parent=1 // pred_check
      _
    $region39: #{apmodel_uv_forward.1} parent=1 // pred_check_branch
      %646 = sbr.rel (0) target = $region41
    $region40: #{apmodel_uv_forward.1} parent=1 // pred_region
      _
    $region41: #{apmodel_uv_forward.1} parent=1 // pred_fallthru
      _
    // Predicated region
    $region42: #{apmodel_uv_forward.1} parent=1 // pred_check
      _
    $region43: #{apmodel_uv_forward.1} parent=1 // pred_check_branch
      %648 = sbr.rel (0) target = $region45
    $region44: #{apmodel_uv_forward.1} parent=1 // pred_region
      _
    $region45: #{apmodel_uv_forward.1} parent=1 // pred_fallthru
      _
    // Predicated region
    $region46: #{apmodel_uv_forward.1} parent=1 // pred_check
      _
    $region47: #{apmodel_uv_forward.1} parent=1 // pred_check_branch
      %650 = sbr.rel (0) target = $region49
    $region48: #{apmodel_uv_forward.1} parent=1 // pred_region
      _
    $region49: #{apmodel_uv_forward.1} parent=1 // pred_fallthru
      _
    // Predicated region
    $region50: #{apmodel_uv_forward.1} parent=1 // pred_check
      _
    $region51: #{apmodel_uv_forward.1} parent=1 // pred_check_branch
      %652 = sbr.rel (0) target = $region53
    $region52: #{apmodel_uv_forward.1} parent=1 // pred_region
      _
    $region53: #{apmodel_uv_forward.1} parent=1 // pred_fallthru
      _
    %653 = vsyncpa [#allocation4], 1
    %654 = vsyncpa [#allocation5], 1

</llo_original>
